<compile_context>
chip_gen: v7x
topology: tpu7x:2x2x1
jax: 0.10.0
libtpu: 0.0.40
codegen_flags: <defaults>
</compile_context>

<pallas_src>
import functools

import jax
import jax.numpy as jnp
from jax.experimental import pallas as pl
from jax.experimental.pallas import tpu as pltpu

D_IN, H1, H2, D_OUT = 80, 700, 500, 5
D_IN_P, H1P, H2P, D_OUT_P = 128, 768, 512, 128   # lane-aligned padded dims
TB_CAP = 2048                                    # max batch-tile rows
NEG_PAD_BIAS = -1e9                              # padded logits -> exp underflows to 0


def _round_up(n, m):
    return (n + m - 1) // m * m


def _cdiv(a, b):
    return -(-a // b)


def _chip_flags():
    """(use bf16 activation math, chip has two TensorCores) for the attached TPU."""
    try:
        kind = jax.devices()[0].device_kind.lower()
    except Exception:
        kind = ""
    bf16_act = ("v6" in kind) or ("v7" in kind)   # v5e and older: no bf16 VPU/EUP
    two_core = "v7" in kind                       # v7x: 2 TensorCores per chip
    return bf16_act, two_core


def mlp_softmax_kernel(x_ref, w1_ref, b1_ref, w2_ref, b2_ref, w3_ref, b3_ref,
                       o_ref, *, act_dtype):
    # Layers 1/2: weights & biases are pre-scaled by 0.5 host-side so
    #   sigmoid(x @ W + b) == 0.5 * tanh(x @ (0.5*W) + 0.5*b) + 0.5
    # -> a single EUP op (tanh) per activation instead of exp + reciprocal.
    z1 = jnp.dot(x_ref[...], w1_ref[...], preferred_element_type=jnp.float32)
    z1 = (z1 + b1_ref[...]).astype(act_dtype)
    h1 = (jnp.tanh(z1) * 0.5 + 0.5).astype(jnp.bfloat16)

    # Padded h1 columns equal 0.5 (= sigmoid(0)) but only multiply zero rows of W2.
    z2 = jnp.dot(h1, w2_ref[...], preferred_element_type=jnp.float32)
    z2 = (z2 + b2_ref[...]).astype(act_dtype)
    h2 = (jnp.tanh(z2) * 0.5 + 0.5).astype(jnp.bfloat16)

    # Layer 3: lane-dense (tb, 128) logits; padded columns carry a -1e9 bias so
    # exp underflows to exactly 0 and the softmax equals the 5-class result.
    logits = jnp.dot(h2, w3_ref[...], preferred_element_type=jnp.float32) + b3_ref[...]

    # Numerically stable softmax; divide on the otherwise-idle EUP slot.
    m = jnp.max(logits, axis=-1, keepdims=True)
    e = jnp.exp(logits - m)
    denom = jnp.sum(e, axis=-1, keepdims=True)
    o_ref[...] = e * pl.reciprocal(denom, approx=True)


def first_network_v2(x, padded_params):
    """x: (B, 80) float32. padded_params: padded/scaled bf16 weights, f32 biases."""
    w1, b1, w2, b2, w3, b3 = padded_params
    B = x.shape[0]
    bf16_act, two_core = _chip_flags()
    act_dtype = jnp.bfloat16 if bf16_act else jnp.float32

    # Batch tiling: big tiles amortize the ~0.35us per-grid-step overhead; on
    # 2-TC chips force an even number of tiles so megacore sharding balances.
    tb = min(TB_CAP, _round_up(B, 8))
    n_tiles = _cdiv(B, tb)
    if two_core and n_tiles > 1 and n_tiles % 2 == 1:
        n_tiles += 1
    tb = _round_up(_cdiv(B, n_tiles), 8)
    b_pad = tb * n_tiles

    # Pad batch rows and input features (80 -> 128) with zeros; cast to bf16.
    x_p = jnp.zeros((b_pad, D_IN_P), jnp.bfloat16)
    x_p = x_p.at[:B, :D_IN].set(x.astype(jnp.bfloat16))

    def const(shape):
        # Constant block index -> fetched once, stays VMEM-resident across steps.
        return pl.BlockSpec(shape, lambda i: (0,) * len(shape))

    flops = 2 * b_pad * (D_IN_P * H1P + H1P * H2P + H2P * D_OUT_P)
    transcendentals = b_pad * (H1P + H2P + D_OUT_P)
    bytes_accessed = (
        x_p.size * 2                              # bf16 activations in
        + (w1.size + w2.size + w3.size) * 2       # bf16 weights
        + (b1.size + b2.size + b3.size) * 4       # f32 biases
        + b_pad * D_OUT_P * 4                     # f32 output
    )

    # v7x: 64 MiB VMEM per TensorCore -> keep the request conservative there.
    vmem_limit = (48 << 20) if two_core else (64 << 20)

    out = pl.pallas_call(
        functools.partial(mlp_softmax_kernel, act_dtype=act_dtype),
        out_shape=jax.ShapeDtypeStruct((b_pad, D_OUT_P), jnp.float32),
        grid=(n_tiles,),
        in_specs=[
            pl.BlockSpec((tb, D_IN_P), lambda i: (i, 0)),  # X: streamed per tile
            const((D_IN_P, H1P)),
            const((1, H1P)),
            const((H1P, H2P)),
            const((1, H2P)),
            const((H2P, D_OUT_P)),
            const((1, D_OUT_P)),
        ],
        out_specs=pl.BlockSpec((tb, D_OUT_P), lambda i: (i, 0)),
        compiler_params=pltpu.CompilerParams(
            dimension_semantics=("parallel",),     # batch tiles are independent
            vmem_limit_bytes=vmem_limit,
        ),
        cost_estimate=pl.CostEstimate(
            flops=flops,
            transcendentals=transcendentals,
            bytes_accessed=bytes_accessed,
        ),
    )(x_p, w1, b1, w2, b2, w3, b3)
    return out[:B, :D_OUT]


def init_params(key):
    """Deterministic PyTorch-style (uniform +/- 1/sqrt(fan_in)) init, unpadded f32."""
    ks = jax.random.split(key, 6)

    def lin(kw, kb, fan_in, fan_out):
        bound = 1.0 / jnp.sqrt(jnp.float32(fan_in))
        w = jax.random.uniform(kw, (fan_in, fan_out), jnp.float32, -bound, bound)
        b = jax.random.uniform(kb, (1, fan_out), jnp.float32, -bound, bound)
        return w, b

    w1, b1 = lin(ks[0], ks[1], D_IN, H1)
    w2, b2 = lin(ks[2], ks[3], H1, H2)
    w3, b3 = lin(ks[4], ks[5], H2, D_OUT)
    return (w1, b1, w2, b2, w3, b3)


def pad_and_cast_params(params):
    """Zero-pad to lane-aligned dims, fold the tanh-form 0.5 pre-scale into
    layers 1/2, cast weights to bf16, and pad the layer-3 bias with -1e9 so
    the padded logits vanish under softmax. All padding is exact."""
    w1, b1, w2, b2, w3, b3 = params
    w1p = jnp.zeros((D_IN_P, H1P), jnp.bfloat16).at[:D_IN, :H1].set(
        (0.5 * w1).astype(jnp.bfloat16))
    b1p = jnp.zeros((1, H1P), jnp.float32).at[:, :H1].set(0.5 * b1)
    w2p = jnp.zeros((H1P, H2P), jnp.bfloat16).at[:H1, :H2].set(
        (0.5 * w2).astype(jnp.bfloat16))
    b2p = jnp.zeros((1, H2P), jnp.float32).at[:, :H2].set(0.5 * b2)
    w3p = jnp.zeros((H2P, D_OUT_P), jnp.bfloat16).at[:H2, :D_OUT].set(
        w3.astype(jnp.bfloat16))
    b3p = jnp.full((1, D_OUT_P), NEG_PAD_BIAS, jnp.float32).at[:, :D_OUT].set(b3)
    return (w1p, b1p, w2p, b2p, w3p, b3p)


def reference(x, params):
    """Plain float32 JAX forward with the original PyTorch module semantics."""
    w1, b1, w2, b2, w3, b3 = params
    h1 = jax.nn.sigmoid(x @ w1 + b1)
    h2 = jax.nn.sigmoid(h1 @ w2 + b2)
    return jax.nn.softmax(h2 @ w3 + b3, axis=-1)


if __name__ == "__main__":
    key = jax.random.PRNGKey(0)
    k_x, k_p = jax.random.split(key)

    params = init_params(k_p)
    padded = pad_and_cast_params(params)

    def check(B, seed):
        x = jax.random.normal(jax.random.PRNGKey(seed), (B, D_IN), dtype=jnp.float32)
        out = jax.block_until_ready(first_network_v2(x, padded))
        ref = reference(x, params)
        assert out.shape == (B, D_OUT)
        # bf16 weights + bf16/tanh activation path -> compare at bf16-level tolerance.
        assert jnp.allclose(out, ref, atol=1e-2, rtol=1e-2), f"mismatch vs f32 reference (B={B})"
        assert jnp.allclose(jnp.sum(out, axis=-1), 1.0, atol=5e-3), f"rows must sum to ~1 (B={B})"

    check(8, 0)      # small batch, single grid step
    check(1000, 1)   # larger batch, single tile + row padding
    check(4104, 2)   # multi-step batch grid (even split on 2-TC chips)

    print("KERNEL_OK")
</pallas_src>

<mosaic_0001>
module attributes {stable_mosaic.version = 11 : i64} {
  func.func @mlp_softmax_kernel(%arg0: i32, %arg1: memref<8x128xbf16, #tpu.memory_space<vmem>>, %arg2: memref<128x768xbf16, #tpu.memory_space<vmem>>, %arg3: memref<1x768xf32, #tpu.memory_space<vmem>>, %arg4: memref<768x512xbf16, #tpu.memory_space<vmem>>, %arg5: memref<1x512xf32, #tpu.memory_space<vmem>>, %arg6: memref<512x128xbf16, #tpu.memory_space<vmem>>, %arg7: memref<1x128xf32, #tpu.memory_space<vmem>>, %arg8: memref<8x128xf32, #tpu.memory_space<vmem>>) attributes {dimension_semantics = [#tpu.dimension_semantics<parallel>], iteration_bounds = array<i64: 1>, scalar_prefetch = 0 : i64, scratch_operands = 0 : i64, tpu.core_type = #tpu.core_type<tc>, window_params = [{transform_indices = @transform_0, window_bounds = array<i64: 8, 128>}, {pipeline_mode = #tpu.pipeline_mode<synchronous>, transform_indices = @transform_1, window_bounds = array<i64: 128, 768>}, {pipeline_mode = #tpu.pipeline_mode<synchronous>, transform_indices = @transform_2, window_bounds = array<i64: 1, 768>}, {pipeline_mode = #tpu.pipeline_mode<synchronous>, transform_indices = @transform_3, window_bounds = array<i64: 768, 512>}, {pipeline_mode = #tpu.pipeline_mode<synchronous>, transform_indices = @transform_4, window_bounds = array<i64: 1, 512>}, {pipeline_mode = #tpu.pipeline_mode<synchronous>, transform_indices = @transform_5, window_bounds = array<i64: 512, 128>}, {pipeline_mode = #tpu.pipeline_mode<synchronous>, transform_indices = @transform_6, window_bounds = array<i64: 1, 128>}, {transform_indices = @transform_7, window_bounds = array<i64: 8, 128>}]} {
    %c0 = arith.constant 0 : index
    %c0_0 = arith.constant 0 : index
    %0 = vector.load %arg1[%c0, %c0_0] : memref<8x128xbf16, #tpu.memory_space<vmem>>, vector<8x128xbf16>
    %c0_1 = arith.constant 0 : index
    %c0_2 = arith.constant 0 : index
    %1 = vector.load %arg2[%c0_1, %c0_2] : memref<128x768xbf16, #tpu.memory_space<vmem>>, vector<128x768xbf16>
    %cst = arith.constant dense<0.000000e+00> : vector<8x768xf32>
    %2 = tpu.matmul %0, %1, %cst {dimension_numbers = #tpu.dot_dimension_numbers<[1], [0], [0], [1], [0, 0, 1, 1], [], []>} : vector<8x128xbf16>, vector<128x768xbf16>, vector<8x768xf32> -> vector<8x768xf32>
    %c0_3 = arith.constant 0 : index
    %c0_4 = arith.constant 0 : index
    %3 = vector.load %arg3[%c0_3, %c0_4] : memref<1x768xf32, #tpu.memory_space<vmem>>, vector<1x768xf32>
    %4 = vector.broadcast %3 : vector<1x768xf32> to vector<8x768xf32>
    %5 = arith.addf %2, %4 : vector<8x768xf32>
    %6 = math.tanh %5 : vector<8x768xf32>
    %cst_5 = arith.constant 5.000000e-01 : f32
    %7 = vector.broadcast %cst_5 : f32 to vector<8x768xf32>
    %8 = arith.mulf %6, %7 : vector<8x768xf32>
    %cst_6 = arith.constant 5.000000e-01 : f32
    %9 = vector.broadcast %cst_6 : f32 to vector<8x768xf32>
    %10 = arith.addf %8, %9 : vector<8x768xf32>
    %11 = arith.truncf %10 : vector<8x768xf32> to vector<8x768xbf16>
    %c0_7 = arith.constant 0 : index
    %c0_8 = arith.constant 0 : index
    %12 = vector.load %arg4[%c0_7, %c0_8] : memref<768x512xbf16, #tpu.memory_space<vmem>>, vector<768x512xbf16>
    %cst_9 = arith.constant dense<0.000000e+00> : vector<8x512xf32>
    %13 = tpu.matmul %11, %12, %cst_9 {dimension_numbers = #tpu.dot_dimension_numbers<[1], [0], [0], [1], [0, 0, 1, 1], [], []>} : vector<8x768xbf16>, vector<768x512xbf16>, vector<8x512xf32> -> vector<8x512xf32>
    %c0_10 = arith.constant 0 : index
    %c0_11 = arith.constant 0 : index
    %14 = vector.load %arg5[%c0_10, %c0_11] : memref<1x512xf32, #tpu.memory_space<vmem>>, vector<1x512xf32>
    %15 = vector.broadcast %14 : vector<1x512xf32> to vector<8x512xf32>
    %16 = arith.addf %13, %15 : vector<8x512xf32>
    %17 = math.tanh %16 : vector<8x512xf32>
    %cst_12 = arith.constant 5.000000e-01 : f32
    %18 = vector.broadcast %cst_12 : f32 to vector<8x512xf32>
    %19 = arith.mulf %17, %18 : vector<8x512xf32>
    %cst_13 = arith.constant 5.000000e-01 : f32
    %20 = vector.broadcast %cst_13 : f32 to vector<8x512xf32>
    %21 = arith.addf %19, %20 : vector<8x512xf32>
    %22 = arith.truncf %21 : vector<8x512xf32> to vector<8x512xbf16>
    %c0_14 = arith.constant 0 : index
    %c0_15 = arith.constant 0 : index
    %23 = vector.load %arg6[%c0_14, %c0_15] : memref<512x128xbf16, #tpu.memory_space<vmem>>, vector<512x128xbf16>
    %cst_16 = arith.constant dense<0.000000e+00> : vector<8x128xf32>
    %24 = tpu.matmul %22, %23, %cst_16 {dimension_numbers = #tpu.dot_dimension_numbers<[1], [0], [0], [1], [0, 0, 1, 1], [], []>} : vector<8x512xbf16>, vector<512x128xbf16>, vector<8x128xf32> -> vector<8x128xf32>
    %c0_17 = arith.constant 0 : index
    %c0_18 = arith.constant 0 : index
    %25 = vector.load %arg7[%c0_17, %c0_18] : memref<1x128xf32, #tpu.memory_space<vmem>>, vector<1x128xf32>
    %26 = vector.broadcast %25 : vector<1x128xf32> to vector<8x128xf32>
    %27 = arith.addf %24, %26 : vector<8x128xf32>
    %cst_19 = arith.constant dense<0xFF800000> : vector<8xf32>
    %28 = vector.multi_reduction <maximumf>, %27, %cst_19 [1] : vector<8x128xf32> to vector<8xf32>
    %29 = vector.shape_cast %28 : vector<8xf32> to vector<8x1xf32>
    %30 = vector.broadcast %29 : vector<8x1xf32> to vector<8x128xf32>
    %31 = arith.subf %27, %30 : vector<8x128xf32>
    %32 = math.exp %31 : vector<8x128xf32>
    %cst_20 = arith.constant dense<0.000000e+00> : vector<8xf32>
    %33 = vector.multi_reduction <add>, %32, %cst_20 [1] : vector<8x128xf32> to vector<8xf32>
    %34 = vector.shape_cast %33 : vector<8xf32> to vector<8x1xf32>
    %35 = tpu.reciprocal %34 {approx = true} : vector<8x1xf32> -> vector<8x1xf32>
    %36 = vector.broadcast %35 : vector<8x1xf32> to vector<8x128xf32>
    %37 = arith.mulf %32, %36 : vector<8x128xf32>
    %c0_21 = arith.constant 0 : index
    %c0_22 = arith.constant 0 : index
    %38 = vector.load %arg8[%c0_21, %c0_22] : memref<8x128xf32, #tpu.memory_space<vmem>>, vector<8x128xf32>
    tpu.vector_store %arg8[%c0_21, %c0_22], %37 {strides = array<i32>} : memref<8x128xf32, #tpu.memory_space<vmem>>, vector<8x128xf32>,
    return
  }
  func.func @transform_0(%arg0: i32) -> (i32, i32) {
    %c0_i32 = arith.constant 0 : i32
    %c0_i32_0 = arith.constant 0 : i32
    return %arg0, %c0_i32 : i32, i32
  }
  func.func @transform_1(%arg0: i32) -> (i32, i32) {
    %c0_i32 = arith.constant 0 : i32
    %c0_i32_0 = arith.constant 0 : i32
    %c0_i32_1 = arith.constant 0 : i32
    return %c0_i32, %c0_i32_0 : i32, i32
  }
  func.func @transform_2(%arg0: i32) -> (i32, i32) {
    %c0_i32 = arith.constant 0 : i32
    %c0_i32_0 = arith.constant 0 : i32
    %c0_i32_1 = arith.constant 0 : i32
    return %c0_i32, %c0_i32_0 : i32, i32
  }
  func.func @transform_3(%arg0: i32) -> (i32, i32) {
    %c0_i32 = arith.constant 0 : i32
    %c0_i32_0 = arith.constant 0 : i32
    %c0_i32_1 = arith.constant 0 : i32
    return %c0_i32, %c0_i32_0 : i32, i32
  }
  func.func @transform_4(%arg0: i32) -> (i32, i32) {
    %c0_i32 = arith.constant 0 : i32
    %c0_i32_0 = arith.constant 0 : i32
    %c0_i32_1 = arith.constant 0 : i32
    return %c0_i32, %c0_i32_0 : i32, i32
  }
  func.func @transform_5(%arg0: i32) -> (i32, i32) {
    %c0_i32 = arith.constant 0 : i32
    %c0_i32_0 = arith.constant 0 : i32
    %c0_i32_1 = arith.constant 0 : i32
    return %c0_i32, %c0_i32_0 : i32, i32
  }
  func.func @transform_6(%arg0: i32) -> (i32, i32) {
    %c0_i32 = arith.constant 0 : i32
    %c0_i32_0 = arith.constant 0 : i32
    %c0_i32_1 = arith.constant 0 : i32
    return %c0_i32, %c0_i32_0 : i32, i32
  }
  func.func @transform_7(%arg0: i32) -> (i32, i32) {
    %c0_i32 = arith.constant 0 : i32
    %c0_i32_0 = arith.constant 0 : i32
    return %arg0, %c0_i32 : i32, i32
  }
}

</mosaic_0001>

<llo_original>
// kernel: tpu_custom_call.1
$region0: #{tpu_custom_call.1}
  #allocation0 [shape = 'u32[]', space=smem, size = 0x4, offset = 0x4, fixed_abs, tag = 'smem constant byte address 0x4 - core index']
  #allocation1 [shape = 'u32[144,128]{1,0:T(1,128)}', space=vmem, size = 0x12000, scoped, tag = 'internal scratch']
  %s0 = inlined_call_operand.hbm [shape: bf16[8,128], index: 0, kind: input, shape index: {}]
  %s1 = inlined_call_operand.hbm [shape: bf16[128,768], index: 1, kind: input, shape index: {}]
  %s2 = inlined_call_operand.hbm [shape: f32[1,768], index: 2, kind: input, shape index: {}]
  %s3 = inlined_call_operand.hbm [shape: bf16[768,512], index: 3, kind: input, shape index: {}]
  %s4 = inlined_call_operand.hbm [shape: f32[1,512], index: 4, kind: input, shape index: {}]
  %s5 = inlined_call_operand.hbm [shape: bf16[512,128], index: 5, kind: input, shape index: {}]
  %s6 = inlined_call_operand.hbm [shape: f32[1,128], index: 6, kind: input, shape index: {}]
  %s7 = inlined_call_operand.hbm [shape: f32[8,128], index: 7, kind: output, shape index: {}]
  %s8 = sld [smem:[#allocation0]]
  $region66: #{tpu_custom_call.1} parent=0
    _
  %s10 = ssub.s32 1, %s8
  %s11 = scalar_select 0, %s10, %s8
  $region1: #{tpu_custom_call.1} parent=0
    #allocation2 [shape = 'u8[2048]{0}', space=vmem, size = 0x800, scoped, tag = 'input window, operand 0, single buffered']
    #allocation3 [shape = 's32[1]{0}', space=sflag, size = 0x4, scoped, tag = 'scoped memory for tpu_custom_call.1']
    #allocation4 [shape = 's32[1]{0}', space=sflag, size = 0x4, scoped, tag = 'scoped memory for tpu_custom_call.1']
    #allocation5 [shape = 'u8[196608]{0}', space=vmem, size = 0x30000, scoped, tag = 'input window, operand 1, single buffered']
    #allocation6 [shape = 's32[1]{0}', space=sflag, size = 0x4, scoped, tag = 'scoped memory for tpu_custom_call.1']
    #allocation7 [shape = 'u8[3072]{0}', space=vmem, size = 0xc00, scoped, tag = 'input window, operand 2, single buffered']
    #allocation8 [shape = 'u8[786432]{0}', space=vmem, size = 0xc0000, scoped, tag = 'input window, operand 3, single buffered']
    #allocation9 [shape = 's32[1]{0}', space=sflag, size = 0x4, scoped, tag = 'scoped memory for tpu_custom_call.1']
    #allocation10 [shape = 'u8[2048]{0}', space=vmem, size = 0x800, scoped, tag = 'input window, operand 4, single buffered']
    #allocation11 [shape = 'u8[131072]{0}', space=vmem, size = 0x20000, scoped, tag = 'input window, operand 5, single buffered']
    #allocation12 [shape = 's32[1]{0}', space=sflag, size = 0x4, scoped, tag = 'scoped memory for tpu_custom_call.1']
    #allocation13 [shape = 'u8[512]{0}', space=vmem, size = 0x400, scoped, tag = 'input window, operand 6, single buffered']
    #allocation14 [shape = 'u8[4096]{0}', space=vmem, size = 0x1000, scoped, tag = 'output window, operand 0, single buffered']
    %12 = vsyncpa [#allocation3], 0
    %13 = vsyncpa [#allocation6], 0
    %14 = vsyncpa [#allocation9], 0
    %15 = vsyncpa [#allocation12], 0
    %16 = vsyncpa [#allocation4], 0
    // Predicated region
    $region2: #{tpu_custom_call.1} parent=1 // pred_check
      _
    $region3: #{tpu_custom_call.1} parent=1 // pred_check_branch
      %18 = sbr.rel (0) target = $region5
    $region4: #{tpu_custom_call.1} parent=1 // pred_region
      %s20 = ssub.s32 64, 64
      %21 = vsyncadd [#allocation3], %s20
      %s23 = sshll.u32 [#allocation2], 4
      %s24 = int_to_ptr.vmem [resolvable:$true] %s23
      %26 = dma.hbm_to_vmem [thread:$0]  %s0, 64, %s24, [#allocation3]
    $region5: #{tpu_custom_call.1} parent=1 // pred_fallthru
      _
    // Predicated region
    $region6: #{tpu_custom_call.1} parent=1 // pred_check
      _
    $region7: #{tpu_custom_call.1} parent=1 // pred_check_branch
      %28 = sbr.rel (0) target = $region9
    $region8: #{tpu_custom_call.1} parent=1 // pred_region
      %s30 = ssub.s32 6144, 6144
      %31 = vsyncadd [#allocation6], %s30
      %s32 = sshll.u32 [#allocation5], 4
      %s33 = int_to_ptr.vmem [resolvable:$true] %s32
      %38 = dma.hbm_to_vmem [thread:$0]  %s1, 6144, %s33, [#allocation6], 384, 384, 24
    $region9: #{tpu_custom_call.1} parent=1 // pred_fallthru
      _
    // Predicated region
    $region10: #{tpu_custom_call.1} parent=1 // pred_check
      _
    $region11: #{tpu_custom_call.1} parent=1 // pred_check_branch
      %40 = sbr.rel (0) target = $region13
    $region12: #{tpu_custom_call.1} parent=1 // pred_region
      %s42 = ssub.s32 96, 96
      %43 = vsyncadd [#allocation6], %s42
      %s45 = sshll.u32 [#allocation7], 4
      %s46 = int_to_ptr.vmem [resolvable:$true] %s45
      %48 = dma.hbm_to_vmem [thread:$0]  %s2, 96, %s46, [#allocation6]
    $region13: #{tpu_custom_call.1} parent=1 // pred_fallthru
      _
    // Predicated region
    $region14: #{tpu_custom_call.1} parent=1 // pred_check
      _
    $region15: #{tpu_custom_call.1} parent=1 // pred_check_branch
      %50 = sbr.rel (0) target = $region17
    $region16: #{tpu_custom_call.1} parent=1 // pred_region
      %s52 = ssub.s32 24576, 24576
      %53 = vsyncadd [#allocation9], %s52
      %s54 = sshll.u32 [#allocation8], 4
      %s55 = int_to_ptr.vmem [resolvable:$true] %s54
      %60 = dma.hbm_to_vmem [thread:$0]  %s3, 24576, %s55, [#allocation9], 256, 256, 16
    $region17: #{tpu_custom_call.1} parent=1 // pred_fallthru
      _
    // Predicated region
    $region18: #{tpu_custom_call.1} parent=1 // pred_check
      _
    $region19: #{tpu_custom_call.1} parent=1 // pred_check_branch
      %62 = sbr.rel (0) target = $region21
    $region20: #{tpu_custom_call.1} parent=1 // pred_region
      %s64 = ssub.s32 64, 64
      %65 = vsyncadd [#allocation9], %s64
      %s67 = sshll.u32 [#allocation10], 4
      %s68 = int_to_ptr.vmem [resolvable:$true] %s67
      %70 = dma.hbm_to_vmem [thread:$0]  %s4, 64, %s68, [#allocation9]
    $region21: #{tpu_custom_call.1} parent=1 // pred_fallthru
      _
    // Predicated region
    $region22: #{tpu_custom_call.1} parent=1 // pred_check
      _
    $region23: #{tpu_custom_call.1} parent=1 // pred_check_branch
      %72 = sbr.rel (0) target = $region25
    $region24: #{tpu_custom_call.1} parent=1 // pred_region
      %s74 = ssub.s32 4096, 4096
      %75 = vsyncadd [#allocation12], %s74
      %s76 = sshll.u32 [#allocation11], 4
      %s77 = int_to_ptr.vmem [resolvable:$true] %s76
      %82 = dma.hbm_to_vmem [thread:$0]  %s5, 4096, %s77, [#allocation12], 64, 64, 4
    $region25: #{tpu_custom_call.1} parent=1 // pred_fallthru
      _
    // Predicated region
    $region26: #{tpu_custom_call.1} parent=1 // pred_check
      _
    $region27: #{tpu_custom_call.1} parent=1 // pred_check_branch
      %84 = sbr.rel (0) target = $region29
    $region28: #{tpu_custom_call.1} parent=1 // pred_region
      %s86 = ssub.s32 16, 16
      %87 = vsyncadd [#allocation12], %s86
      %s89 = sshll.u32 [#allocation13], 4
      %s90 = int_to_ptr.vmem [resolvable:$true] %s89
      %92 = dma.hbm_to_vmem [thread:$0]  %s6, 16, %s90, [#allocation12]
    $region29: #{tpu_custom_call.1} parent=1 // pred_fallthru
      _
    // Predicated region
    $region30: #{tpu_custom_call.1} parent=1 // pred_check
      _
    $region31: #{tpu_custom_call.1} parent=1 // pred_check_branch
      %94 = sbr.rel (0) target = $region33
    $region32: #{tpu_custom_call.1} parent=1 // pred_region
      %95 = dma.done [#allocation3], 64
    $region33: #{tpu_custom_call.1} parent=1 // pred_fallthru
      _
    // Predicated region
    $region34: #{tpu_custom_call.1} parent=1 // pred_check
      _
    $region35: #{tpu_custom_call.1} parent=1 // pred_check_branch
      %97 = sbr.rel (0) target = $region37
    $region36: #{tpu_custom_call.1} parent=1 // pred_region
      %98 = dma.done [#allocation6], 6144
    $region37: #{tpu_custom_call.1} parent=1 // pred_fallthru
      _
    // Predicated region
    $region38: #{tpu_custom_call.1} parent=1 // pred_check
      _
    $region39: #{tpu_custom_call.1} parent=1 // pred_check_branch
      %100 = sbr.rel (0) target = $region41
    $region40: #{tpu_custom_call.1} parent=1 // pred_region
      %101 = dma.done [#allocation6], 96
    $region41: #{tpu_custom_call.1} parent=1 // pred_fallthru
      _
    // Predicated region
    $region42: #{tpu_custom_call.1} parent=1 // pred_check
      _
    $region43: #{tpu_custom_call.1} parent=1 // pred_check_branch
      %103 = sbr.rel (0) target = $region45
    $region44: #{tpu_custom_call.1} parent=1 // pred_region
      %104 = dma.done [#allocation9], 24576
    $region45: #{tpu_custom_call.1} parent=1 // pred_fallthru
      _
    // Predicated region
    $region46: #{tpu_custom_call.1} parent=1 // pred_check
      _
    $region47: #{tpu_custom_call.1} parent=1 // pred_check_branch
      %106 = sbr.rel (0) target = $region49
    $region48: #{tpu_custom_call.1} parent=1 // pred_region
      %107 = dma.done [#allocation9], 64
    $region49: #{tpu_custom_call.1} parent=1 // pred_fallthru
      _
    // Predicated region
    $region50: #{tpu_custom_call.1} parent=1 // pred_check
      _
    $region51: #{tpu_custom_call.1} parent=1 // pred_check_branch
      %109 = sbr.rel (0) target = $region53
    $region52: #{tpu_custom_call.1} parent=1 // pred_region
      %110 = dma.done [#allocation12], 4096
    $region53: #{tpu_custom_call.1} parent=1 // pred_fallthru
      _
    // Predicated region
    $region54: #{tpu_custom_call.1} parent=1 // pred_check
      _
    $region55: #{tpu_custom_call.1} parent=1 // pred_check_branch
      %112 = sbr.rel (0) target = $region57
    $region56: #{tpu_custom_call.1} parent=1 // pred_region
      %113 = dma.done [#allocation12], 16
    $region57: #{tpu_custom_call.1} parent=1 // pred_fallthru
      _
    %v115 = vld [vmem:[#allocation2] sm:$0xf]
    %v116 = vld [vmem:[#allocation5] sm:$0xff]
    %v117 = vld [vmem:[#allocation5 + $0x8] sm:$0xff]
    %v118 = vld [vmem:[#allocation5 + $0x10] sm:$0xff]
    %v119 = vld [vmem:[#allocation5 + $0x18] sm:$0xff]
    %v120 = vld [vmem:[#allocation5 + $0x20] sm:$0xff]
    %v121 = vld [vmem:[#allocation5 + $0x28] sm:$0xff]
    %v122 = vld [vmem:[#allocation5 + $0x30] sm:$0xff]
    %v123 = vld [vmem:[#allocation5 + $0x38] sm:$0xff]
    %v124 = vld [vmem:[#allocation5 + $0x40] sm:$0xff]
    %v125 = vld [vmem:[#allocation5 + $0x48] sm:$0xff]
    %v126 = vld [vmem:[#allocation5 + $0x50] sm:$0xff]
    %v127 = vld [vmem:[#allocation5 + $0x58] sm:$0xff]
    %v128 = vld [vmem:[#allocation5 + $0x60] sm:$0xff]
    %v129 = vld [vmem:[#allocation5 + $0x68] sm:$0xff]
    %v130 = vld [vmem:[#allocation5 + $0x70] sm:$0xff]
    %v131 = vld [vmem:[#allocation5 + $0x78] sm:$0xff]
    %v132 = vld [vmem:[#allocation5 + $0x80] sm:$0xff]
    %v133 = vld [vmem:[#allocation5 + $0x88] sm:$0xff]
    %v134 = vld [vmem:[#allocation5 + $0x90] sm:$0xff]
    %v135 = vld [vmem:[#allocation5 + $0x98] sm:$0xff]
    %v136 = vld [vmem:[#allocation5 + $0xa0] sm:$0xff]
    %v137 = vld [vmem:[#allocation5 + $0xa8] sm:$0xff]
    %v138 = vld [vmem:[#allocation5 + $0xb0] sm:$0xff]
    %v139 = vld [vmem:[#allocation5 + $0xb8] sm:$0xff]
    %v140 = vld [vmem:[#allocation5 + $0xc0] sm:$0xff]
    %v141 = vld [vmem:[#allocation5 + $0xc8] sm:$0xff]
    %v142 = vld [vmem:[#allocation5 + $0xd0] sm:$0xff]
    %v143 = vld [vmem:[#allocation5 + $0xd8] sm:$0xff]
    %v144 = vld [vmem:[#allocation5 + $0xe0] sm:$0xff]
    %v145 = vld [vmem:[#allocation5 + $0xe8] sm:$0xff]
    %v146 = vld [vmem:[#allocation5 + $0xf0] sm:$0xff]
    %v147 = vld [vmem:[#allocation5 + $0xf8] sm:$0xff]
    %v148 = vld [vmem:[#allocation5 + $0x100] sm:$0xff]
    %v149 = vld [vmem:[#allocation5 + $0x108] sm:$0xff]
    %v150 = vld [vmem:[#allocation5 + $0x110] sm:$0xff]
    %v151 = vld [vmem:[#allocation5 + $0x118] sm:$0xff]
    %v152 = vld [vmem:[#allocation5 + $0x120] sm:$0xff]
    %v153 = vld [vmem:[#allocation5 + $0x128] sm:$0xff]
    %v154 = vld [vmem:[#allocation5 + $0x130] sm:$0xff]
    %v155 = vld [vmem:[#allocation5 + $0x138] sm:$0xff]
    %v156 = vld [vmem:[#allocation5 + $0x140] sm:$0xff]
    %v157 = vld [vmem:[#allocation5 + $0x148] sm:$0xff]
    %v158 = vld [vmem:[#allocation5 + $0x150] sm:$0xff]
    %v159 = vld [vmem:[#allocation5 + $0x158] sm:$0xff]
    %v160 = vld [vmem:[#allocation5 + $0x160] sm:$0xff]
    %v161 = vld [vmem:[#allocation5 + $0x168] sm:$0xff]
    %v162 = vld [vmem:[#allocation5 + $0x170] sm:$0xff]
    %v163 = vld [vmem:[#allocation5 + $0x178] sm:$0xff]
    %v164 = vld [vmem:[#allocation7] sm:$0x3f]
    %v166 = vlaneseq
    %v167 = vshrl.u32 %v166, 7
    %v168 = vsub.s32 0, %v167
    %v169 = vrot.slane %v164, %v168
    %v170 = vlaneseq
    %v171 = vshrl.u32 %v170, 7
    %v172 = vsub.s32 1, %v171
    %v173 = vrot.slane %v164, %v172
    %v174 = vlaneseq
    %v175 = vshrl.u32 %v174, 7
    %v176 = vsub.s32 2, %v175
    %v177 = vrot.slane %v164, %v176
    %v178 = vlaneseq
    %v179 = vshrl.u32 %v178, 7
    %v180 = vsub.s32 3, %v179
    %v181 = vrot.slane %v164, %v180
    %v182 = vlaneseq
    %v183 = vshrl.u32 %v182, 7
    %v184 = vsub.s32 4, %v183
    %v185 = vrot.slane %v164, %v184
    %v186 = vlaneseq
    %v187 = vshrl.u32 %v186, 7
    %v188 = vsub.s32 5, %v187
    %v189 = vrot.slane %v164, %v188
    %v244 = vunpack.c.l.b16 %v116
    %v245 = vunpack.c.h.b16 %v116
    %v246 = vunpack.c.l.b16 %v117
    %v247 = vunpack.c.h.b16 %v117
    %v248 = vunpack.c.l.b16 %v118
    %v249 = vunpack.c.h.b16 %v118
    %v250 = vunpack.c.l.b16 %v119
    %v251 = vunpack.c.h.b16 %v119
    %v252 = vunpack.c.l.b16 %v120
    %v253 = vunpack.c.h.b16 %v120
    %v254 = vunpack.c.l.b16 %v121
    %v255 = vunpack.c.h.b16 %v121
    %v256 = vunpack.c.l.b16 %v122
    %v257 = vunpack.c.h.b16 %v122
    %v258 = vunpack.c.l.b16 %v123
    %v259 = vunpack.c.h.b16 %v123
    %v260 = vunpack.c.l.b16 %v124
    %v261 = vunpack.c.h.b16 %v124
    %v262 = vunpack.c.l.b16 %v125
    %v263 = vunpack.c.h.b16 %v125
    %v264 = vunpack.c.l.b16 %v126
    %v265 = vunpack.c.h.b16 %v126
    %v266 = vunpack.c.l.b16 %v127
    %v267 = vunpack.c.h.b16 %v127
    %v268 = vunpack.c.l.b16 %v128
    %v269 = vunpack.c.h.b16 %v128
    %v270 = vunpack.c.l.b16 %v129
    %v271 = vunpack.c.h.b16 %v129
    %v272 = vunpack.c.l.b16 %v130
    %v273 = vunpack.c.h.b16 %v130
    %v274 = vunpack.c.l.b16 %v131
    %v275 = vunpack.c.h.b16 %v131
    %v276 = vunpack.c.l.b16 %v132
    %v277 = vunpack.c.h.b16 %v132
    %v278 = vunpack.c.l.b16 %v133
    %v279 = vunpack.c.h.b16 %v133
    %v280 = vunpack.c.l.b16 %v134
    %v281 = vunpack.c.h.b16 %v134
    %v282 = vunpack.c.l.b16 %v135
    %v283 = vunpack.c.h.b16 %v135
    %v284 = vunpack.c.l.b16 %v136
    %v285 = vunpack.c.h.b16 %v136
    %v286 = vunpack.c.l.b16 %v137
    %v287 = vunpack.c.h.b16 %v137
    %v288 = vunpack.c.l.b16 %v138
    %v289 = vunpack.c.h.b16 %v138
    %v290 = vunpack.c.l.b16 %v139
    %v291 = vunpack.c.h.b16 %v139
    %v292 = vunpack.c.l.b16 %v140
    %v293 = vunpack.c.h.b16 %v140
    %v294 = vunpack.c.l.b16 %v141
    %v295 = vunpack.c.h.b16 %v141
    %v296 = vunpack.c.l.b16 %v142
    %v297 = vunpack.c.h.b16 %v142
    %v298 = vunpack.c.l.b16 %v143
    %v299 = vunpack.c.h.b16 %v143
    %v300 = vunpack.c.l.b16 %v144
    %v301 = vunpack.c.h.b16 %v144
    %v302 = vunpack.c.l.b16 %v145
    %v303 = vunpack.c.h.b16 %v145
    %v304 = vunpack.c.l.b16 %v146
    %v305 = vunpack.c.h.b16 %v146
    %v306 = vunpack.c.l.b16 %v147
    %v307 = vunpack.c.h.b16 %v147
    %v308 = vunpack.c.l.b16 %v148
    %v309 = vunpack.c.h.b16 %v148
    %v310 = vunpack.c.l.b16 %v149
    %v311 = vunpack.c.h.b16 %v149
    %v312 = vunpack.c.l.b16 %v150
    %v313 = vunpack.c.h.b16 %v150
    %v314 = vunpack.c.l.b16 %v151
    %v315 = vunpack.c.h.b16 %v151
    %v316 = vunpack.c.l.b16 %v152
    %v317 = vunpack.c.h.b16 %v152
    %v318 = vunpack.c.l.b16 %v153
    %v319 = vunpack.c.h.b16 %v153
    %v320 = vunpack.c.l.b16 %v154
    %v321 = vunpack.c.h.b16 %v154
    %v322 = vunpack.c.l.b16 %v155
    %v323 = vunpack.c.h.b16 %v155
    %v324 = vunpack.c.l.b16 %v156
    %v325 = vunpack.c.h.b16 %v156
    %v326 = vunpack.c.l.b16 %v157
    %v327 = vunpack.c.h.b16 %v157
    %v328 = vunpack.c.l.b16 %v158
    %v329 = vunpack.c.h.b16 %v158
    %v330 = vunpack.c.l.b16 %v159
    %v331 = vunpack.c.h.b16 %v159
    %v332 = vunpack.c.l.b16 %v160
    %v333 = vunpack.c.h.b16 %v160
    %v334 = vunpack.c.l.b16 %v161
    %v335 = vunpack.c.h.b16 %v161
    %v336 = vunpack.c.l.b16 %v162
    %v337 = vunpack.c.h.b16 %v162
    %v338 = vunpack.c.l.b16 %v163
    %v339 = vunpack.c.h.b16 %v163
    %v340 = vpack.c.b16 %v250, %v244
    %v341 = vpack.c.b16 %v251, %v245
    %v342 = vpack.c.b16 %v252, %v246
    %v343 = vpack.c.b16 %v253, %v247
    %v344 = vpack.c.b16 %v254, %v248
    %v345 = vpack.c.b16 %v255, %v249
    %v346 = vpack.c.b16 %v262, %v256
    %v347 = vpack.c.b16 %v263, %v257
    %v348 = vpack.c.b16 %v264, %v258
    %v349 = vpack.c.b16 %v265, %v259
    %v350 = vpack.c.b16 %v266, %v260
    %v351 = vpack.c.b16 %v267, %v261
    %v352 = vpack.c.b16 %v274, %v268
    %v353 = vpack.c.b16 %v275, %v269
    %v354 = vpack.c.b16 %v276, %v270
    %v355 = vpack.c.b16 %v277, %v271
    %v356 = vpack.c.b16 %v278, %v272
    %v357 = vpack.c.b16 %v279, %v273
    %v358 = vpack.c.b16 %v286, %v280
    %v359 = vpack.c.b16 %v287, %v281
    %v360 = vpack.c.b16 %v288, %v282
    %v361 = vpack.c.b16 %v289, %v283
    %v362 = vpack.c.b16 %v290, %v284
    %v363 = vpack.c.b16 %v291, %v285
    %v364 = vpack.c.b16 %v298, %v292
    %v365 = vpack.c.b16 %v299, %v293
    %v366 = vpack.c.b16 %v300, %v294
    %v367 = vpack.c.b16 %v301, %v295
    %v368 = vpack.c.b16 %v302, %v296
    %v369 = vpack.c.b16 %v303, %v297
    %v370 = vpack.c.b16 %v310, %v304
    %v371 = vpack.c.b16 %v311, %v305
    %v372 = vpack.c.b16 %v312, %v306
    %v373 = vpack.c.b16 %v313, %v307
    %v374 = vpack.c.b16 %v314, %v308
    %v375 = vpack.c.b16 %v315, %v309
    %v376 = vpack.c.b16 %v322, %v316
    %v377 = vpack.c.b16 %v323, %v317
    %v378 = vpack.c.b16 %v324, %v318
    %v379 = vpack.c.b16 %v325, %v319
    %v380 = vpack.c.b16 %v326, %v320
    %v381 = vpack.c.b16 %v327, %v321
    %v382 = vpack.c.b16 %v334, %v328
    %v383 = vpack.c.b16 %v335, %v329
    %v384 = vpack.c.b16 %v336, %v330
    %v385 = vpack.c.b16 %v337, %v331
    %v386 = vpack.c.b16 %v338, %v332
    %v387 = vpack.c.b16 %v339, %v333
    %436 = vmatprep.subr.bf16.mxu0 %v341
    %437 = vmatpush1.bf16.msra.mxu0 %v340
    %438 = vmatprep.subr.bf16.mxu0 %v347
    %439 = vmatpush1.bf16.msra.mxu0 %v346
    %440 = vmatprep.subr.bf16.mxu0 %v353
    %441 = vmatpush1.bf16.msra.mxu0 %v352
    %442 = vmatprep.subr.bf16.mxu0 %v359
    %443 = vmatpush1.bf16.msra.mxu0 %v358
    %444 = vmatprep.subr.bf16.mxu0 %v365
    %445 = vmatpush1.bf16.msra.mxu0 %v364
    %446 = vmatprep.subr.bf16.mxu0 %v371
    %447 = vmatpush1.bf16.msra.mxu0 %v370
    %448 = vmatprep.subr.bf16.mxu0 %v377
    %449 = vmatpush1.bf16.msra.mxu0 %v376
    %450 = vmatprep.subr.bf16.mxu0 %v383
    %451 = vmatpush1.bf16.msra.mxu0 %v382
    %452 = vmatprep.subr.bf16.mxu0 0
    %453 = vmatpush1.bf16.msra.mxu0 0
    %454 = vmatprep.subr.bf16.mxu0 0
    %455 = vmatpush1.bf16.msra.mxu0 0
    %456 = vmatprep.subr.bf16.mxu0 0
    %457 = vmatpush1.bf16.msra.mxu0 0
    %458 = vmatprep.subr.bf16.mxu0 0
    %459 = vmatpush1.bf16.msra.mxu0 0
    %460 = vmatprep.subr.bf16.mxu0 0
    %461 = vmatpush1.bf16.msra.mxu0 0
    %462 = vmatprep.subr.bf16.mxu0 0
    %463 = vmatpush1.bf16.msra.mxu0 0
    %464 = vmatprep.subr.bf16.mxu0 0
    %465 = vmatpush1.bf16.msra.mxu0 0
    %466 = vmatprep.subr.bf16.mxu0 0
    %467 = vmatpush1.bf16.msra.mxu0 0
    %468 = vmatprep.mubr.bf16.mxu0 0
    %469 = vmatmul.mubr.bf16.gmra.mrb[0].mxu0 %v115
    %v470 = vpop.f32.mrb[0].mxu0
    %v471 = vadd.f32 %v169, %v470
    %v472 = vpop.f32.mrb[0].mxu0
    %v473 = vadd.f32 %v173, %v472
    %v474 = vpop.f32.mrb[0].mxu0
    %v475 = vpop.f32.mrb[0].mxu0
    %476 = vdwg.mxu0
    %477 = vmatprep.subr.bf16.mxu0 %v343
    %478 = vmatpush1.bf16.msra.mxu0 %v342
    %479 = vmatprep.subr.bf16.mxu0 %v349
    %480 = vmatpush1.bf16.msra.mxu0 %v348
    %481 = vmatprep.subr.bf16.mxu0 %v355
    %482 = vmatpush1.bf16.msra.mxu0 %v354
    %483 = vmatprep.subr.bf16.mxu0 %v361
    %484 = vmatpush1.bf16.msra.mxu0 %v360
    %485 = vmatprep.subr.bf16.mxu0 %v367
    %486 = vmatpush1.bf16.msra.mxu0 %v366
    %487 = vmatprep.subr.bf16.mxu0 %v373
    %488 = vmatpush1.bf16.msra.mxu0 %v372
    %489 = vmatprep.subr.bf16.mxu0 %v379
    %490 = vmatpush1.bf16.msra.mxu0 %v378
    %491 = vmatprep.subr.bf16.mxu0 %v385
    %492 = vmatpush1.bf16.msra.mxu0 %v384
    %493 = vmatprep.subr.bf16.mxu0 0
    %494 = vmatpush1.bf16.msra.mxu0 0
    %495 = vmatprep.subr.bf16.mxu0 0
    %496 = vmatpush1.bf16.msra.mxu0 0
    %497 = vmatprep.subr.bf16.mxu0 0
    %498 = vmatpush1.bf16.msra.mxu0 0
    %499 = vmatprep.subr.bf16.mxu0 0
    %500 = vmatpush1.bf16.msra.mxu0 0
    %501 = vmatprep.subr.bf16.mxu0 0
    %502 = vmatpush1.bf16.msra.mxu0 0
    %503 = vmatprep.subr.bf16.mxu0 0
    %504 = vmatpush1.bf16.msra.mxu0 0
    %505 = vmatprep.subr.bf16.mxu0 0
    %506 = vmatpush1.bf16.msra.mxu0 0
    %507 = vmatprep.subr.bf16.mxu0 0
    %508 = vmatpush1.bf16.msra.mxu0 0
    %509 = vmatprep.mubr.bf16.mxu0 0
    %510 = vmatmul.mubr.bf16.gmra.mrb[0].mxu0 %v115
    %v511 = vpop.f32.mrb[0].mxu0
    %v512 = vadd.f32 %v177, %v511
    %v513 = vpop.f32.mrb[0].mxu0
    %v514 = vadd.f32 %v181, %v513
    %v515 = vpop.f32.mrb[0].mxu0
    %v516 = vpop.f32.mrb[0].mxu0
    %517 = vdwg.mxu0
    %518 = vmatprep.subr.bf16.mxu0 %v345
    %519 = vmatpush1.bf16.msra.mxu0 %v344
    %520 = vmatprep.subr.bf16.mxu0 %v351
    %521 = vmatpush1.bf16.msra.mxu0 %v350
    %522 = vmatprep.subr.bf16.mxu0 %v357
    %523 = vmatpush1.bf16.msra.mxu0 %v356
    %524 = vmatprep.subr.bf16.mxu0 %v363
    %525 = vmatpush1.bf16.msra.mxu0 %v362
    %526 = vmatprep.subr.bf16.mxu0 %v369
    %527 = vmatpush1.bf16.msra.mxu0 %v368
    %528 = vmatprep.subr.bf16.mxu0 %v375
    %529 = vmatpush1.bf16.msra.mxu0 %v374
    %530 = vmatprep.subr.bf16.mxu0 %v381
    %531 = vmatpush1.bf16.msra.mxu0 %v380
    %532 = vmatprep.subr.bf16.mxu0 %v387
    %533 = vmatpush1.bf16.msra.mxu0 %v386
    %534 = vmatprep.subr.bf16.mxu0 0
    %535 = vmatpush1.bf16.msra.mxu0 0
    %536 = vmatprep.subr.bf16.mxu0 0
    %537 = vmatpush1.bf16.msra.mxu0 0
    %538 = vmatprep.subr.bf16.mxu0 0
    %539 = vmatpush1.bf16.msra.mxu0 0
    %540 = vmatprep.subr.bf16.mxu0 0
    %541 = vmatpush1.bf16.msra.mxu0 0
    %542 = vmatprep.subr.bf16.mxu0 0
    %543 = vmatpush1.bf16.msra.mxu0 0
    %544 = vmatprep.subr.bf16.mxu0 0
    %545 = vmatpush1.bf16.msra.mxu0 0
    %546 = vmatprep.subr.bf16.mxu0 0
    %547 = vmatpush1.bf16.msra.mxu0 0
    %548 = vmatprep.subr.bf16.mxu0 0
    %549 = vmatpush1.bf16.msra.mxu0 0
    %550 = vmatprep.mubr.bf16.mxu0 0
    %551 = vmatmul.mubr.bf16.gmra.mrb[0].mxu0 %v115
    %v552 = vpop.f32.mrb[0].mxu0
    %v553 = vadd.f32 %v185, %v552
    %v554 = vpop.f32.mrb[0].mxu0
    %v555 = vadd.f32 %v189, %v554
    %v556 = vpop.f32.mrb[0].mxu0
    %v557 = vpop.f32.mrb[0].mxu0
    %558 = vdwg.mxu0
    %v559 = vtanh.pop %v471
    %v560 = vtanh.pop %v473
    %v561 = vtanh.pop %v512
    %v562 = vtanh.pop %v514
    %v563 = vtanh.pop %v553
    %v564 = vtanh.pop %v555
    %v565 = vmul.f32 %v559, 0.5
    %v566 = vmul.f32 %v560, 0.5
    %v567 = vmul.f32 %v561, 0.5
    %v568 = vmul.f32 %v562, 0.5
    %v569 = vmul.f32 %v563, 0.5
    %v570 = vmul.f32 %v564, 0.5
    %v571 = vadd.f32 %v565, 0.5
    %v572 = vadd.f32 %v566, 0.5
    %v573 = vadd.f32 %v567, 0.5
    %v574 = vadd.f32 %v568, 0.5
    %v575 = vadd.f32 %v569, 0.5
    %v576 = vadd.f32 %v570, 0.5
    %v577 = vpack.c.bf16 %v571, %v571
    %v578 = vpack.c.bf16 %v572, %v572
    %v579 = vpack.c.bf16 %v573, %v573
    %v580 = vpack.c.bf16 %v574, %v574
    %v581 = vpack.c.bf16 %v575, %v575
    %v582 = vpack.c.bf16 %v576, %v576
    %v583 = vld [vmem:[#allocation8] sm:$0xff]
    %v584 = vld [vmem:[#allocation8 + $0x8] sm:$0xff]
    %v585 = vld [vmem:[#allocation8 + $0x10] sm:$0xff]
    %v586 = vld [vmem:[#allocation8 + $0x18] sm:$0xff]
    %v587 = vld [vmem:[#allocation8 + $0x20] sm:$0xff]
    %v588 = vld [vmem:[#allocation8 + $0x28] sm:$0xff]
    %v589 = vld [vmem:[#allocation8 + $0x30] sm:$0xff]
    %v590 = vld [vmem:[#allocation8 + $0x38] sm:$0xff]
    %v591 = vld [vmem:[#allocation8 + $0x40] sm:$0xff]
    %v592 = vld [vmem:[#allocation8 + $0x48] sm:$0xff]
    %v593 = vld [vmem:[#allocation8 + $0x50] sm:$0xff]
    %v594 = vld [vmem:[#allocation8 + $0x58] sm:$0xff]
    %v595 = vld [vmem:[#allocation8 + $0x60] sm:$0xff]
    %v596 = vld [vmem:[#allocation8 + $0x68] sm:$0xff]
    %v597 = vld [vmem:[#allocation8 + $0x70] sm:$0xff]
    %v598 = vld [vmem:[#allocation8 + $0x78] sm:$0xff]
    %v599 = vld [vmem:[#allocation8 + $0x80] sm:$0xff]
    %v600 = vld [vmem:[#allocation8 + $0x88] sm:$0xff]
    %v601 = vld [vmem:[#allocation8 + $0x90] sm:$0xff]
    %v602 = vld [vmem:[#allocation8 + $0x98] sm:$0xff]
    %v603 = vld [vmem:[#allocation8 + $0xa0] sm:$0xff]
    %v604 = vld [vmem:[#allocation8 + $0xa8] sm:$0xff]
    %v605 = vld [vmem:[#allocation8 + $0xb0] sm:$0xff]
    %v606 = vld [vmem:[#allocation8 + $0xb8] sm:$0xff]
    %v607 = vld [vmem:[#allocation8 + $0xc0] sm:$0xff]
    %v608 = vld [vmem:[#allocation8 + $0xc8] sm:$0xff]
    %v609 = vld [vmem:[#allocation8 + $0xd0] sm:$0xff]
    %v610 = vld [vmem:[#allocation8 + $0xd8] sm:$0xff]
    %v611 = vld [vmem:[#allocation8 + $0xe0] sm:$0xff]
    %v612 = vld [vmem:[#allocation8 + $0xe8] sm:$0xff]
    %v613 = vld [vmem:[#allocation8 + $0xf0] sm:$0xff]
    %v614 = vld [vmem:[#allocation8 + $0xf8] sm:$0xff]
    %v615 = vld [vmem:[#allocation8 + $0x100] sm:$0xff]
    %v616 = vld [vmem:[#allocation8 + $0x108] sm:$0xff]
    %v617 = vld [vmem:[#allocation8 + $0x110] sm:$0xff]
    %v618 = vld [vmem:[#allocation8 + $0x118] sm:$0xff]
    %v619 = vld [vmem:[#allocation8 + $0x120] sm:$0xff]
    %v620 = vld [vmem:[#allocation8 + $0x128] sm:$0xff]
    %v621 = vld [vmem:[#allocation8 + $0x130] sm:$0xff]
    %v622 = vld [vmem:[#allocation8 + $0x138] sm:$0xff]
    %v623 = vld [vmem:[#allocation8 + $0x140] sm:$0xff]
    %v624 = vld [vmem:[#allocation8 + $0x148] sm:$0xff]
    %v625 = vld [vmem:[#allocation8 + $0x150] sm:$0xff]
    %v626 = vld [vmem:[#allocation8 + $0x158] sm:$0xff]
    %v627 = vld [vmem:[#allocation8 + $0x160] sm:$0xff]
    %v628 = vld [vmem:[#allocation8 + $0x168] sm:$0xff]
    %v629 = vld [vmem:[#allocation8 + $0x170] sm:$0xff]
    %v630 = vld [vmem:[#allocation8 + $0x178] sm:$0xff]
    %v631 = vld [vmem:[#allocation8 + $0x180] sm:$0xff]
    %v632 = vld [vmem:[#allocation8 + $0x188] sm:$0xff]
    %v633 = vld [vmem:[#allocation8 + $0x190] sm:$0xff]
    %v634 = vld [vmem:[#allocation8 + $0x198] sm:$0xff]
    %v635 = vld [vmem:[#allocation8 + $0x1a0] sm:$0xff]
    %v636 = vld [vmem:[#allocation8 + $0x1a8] sm:$0xff]
    %v637 = vld [vmem:[#allocation8 + $0x1b0] sm:$0xff]
    %v638 = vld [vmem:[#allocation8 + $0x1b8] sm:$0xff]
    %v639 = vld [vmem:[#allocation8 + $0x1c0] sm:$0xff]
    %v640 = vld [vmem:[#allocation8 + $0x1c8] sm:$0xff]
    %v641 = vld [vmem:[#allocation8 + $0x1d0] sm:$0xff]
    %v642 = vld [vmem:[#allocation8 + $0x1d8] sm:$0xff]
    %v643 = vld [vmem:[#allocation8 + $0x1e0] sm:$0xff]
    %v644 = vld [vmem:[#allocation8 + $0x1e8] sm:$0xff]
    %v645 = vld [vmem:[#allocation8 + $0x1f0] sm:$0xff]
    %v646 = vld [vmem:[#allocation8 + $0x1f8] sm:$0xff]
    %v647 = vld [vmem:[#allocation8 + $0x200] sm:$0xff]
    %v648 = vld [vmem:[#allocation8 + $0x208] sm:$0xff]
    %v649 = vld [vmem:[#allocation8 + $0x210] sm:$0xff]
    %v650 = vld [vmem:[#allocation8 + $0x218] sm:$0xff]
    %v651 = vld [vmem:[#allocation8 + $0x220] sm:$0xff]
    %v652 = vld [vmem:[#allocation8 + $0x228] sm:$0xff]
    %v653 = vld [vmem:[#allocation8 + $0x230] sm:$0xff]
    %v654 = vld [vmem:[#allocation8 + $0x238] sm:$0xff]
    %v655 = vld [vmem:[#allocation8 + $0x240] sm:$0xff]
    %v656 = vld [vmem:[#allocation8 + $0x248] sm:$0xff]
    %v657 = vld [vmem:[#allocation8 + $0x250] sm:$0xff]
    %v658 = vld [vmem:[#allocation8 + $0x258] sm:$0xff]
    %v659 = vld [vmem:[#allocation8 + $0x260] sm:$0xff]
    %v660 = vld [vmem:[#allocation8 + $0x268] sm:$0xff]
    %v661 = vld [vmem:[#allocation8 + $0x270] sm:$0xff]
    %v662 = vld [vmem:[#allocation8 + $0x278] sm:$0xff]
    %v663 = vld [vmem:[#allocation8 + $0x280] sm:$0xff]
    %v664 = vld [vmem:[#allocation8 + $0x288] sm:$0xff]
    %v665 = vld [vmem:[#allocation8 + $0x290] sm:$0xff]
    %v666 = vld [vmem:[#allocation8 + $0x298] sm:$0xff]
    %v667 = vld [vmem:[#allocation8 + $0x2a0] sm:$0xff]
    %v668 = vld [vmem:[#allocation8 + $0x2a8] sm:$0xff]
    %v669 = vld [vmem:[#allocation8 + $0x2b0] sm:$0xff]
    %v670 = vld [vmem:[#allocation8 + $0x2b8] sm:$0xff]
    %v671 = vld [vmem:[#allocation8 + $0x2c0] sm:$0xff]
    %v672 = vld [vmem:[#allocation8 + $0x2c8] sm:$0xff]
    %v673 = vld [vmem:[#allocation8 + $0x2d0] sm:$0xff]
    %v674 = vld [vmem:[#allocation8 + $0x2d8] sm:$0xff]
    %v675 = vld [vmem:[#allocation8 + $0x2e0] sm:$0xff]
    %v676 = vld [vmem:[#allocation8 + $0x2e8] sm:$0xff]
    %v677 = vld [vmem:[#allocation8 + $0x2f0] sm:$0xff]
    %v678 = vld [vmem:[#allocation8 + $0x2f8] sm:$0xff]
    %v679 = vld [vmem:[#allocation8 + $0x300] sm:$0xff]
    %v680 = vld [vmem:[#allocation8 + $0x308] sm:$0xff]
    %v681 = vld [vmem:[#allocation8 + $0x310] sm:$0xff]
    %v682 = vld [vmem:[#allocation8 + $0x318] sm:$0xff]
    %v683 = vld [vmem:[#allocation8 + $0x320] sm:$0xff]
    %v684 = vld [vmem:[#allocation8 + $0x328] sm:$0xff]
    %v685 = vld [vmem:[#allocation8 + $0x330] sm:$0xff]
    %v686 = vld [vmem:[#allocation8 + $0x338] sm:$0xff]
    %v687 = vld [vmem:[#allocation8 + $0x340] sm:$0xff]
    %v688 = vld [vmem:[#allocation8 + $0x348] sm:$0xff]
    %v689 = vld [vmem:[#allocation8 + $0x350] sm:$0xff]
    %v690 = vld [vmem:[#allocation8 + $0x358] sm:$0xff]
    %v691 = vld [vmem:[#allocation8 + $0x360] sm:$0xff]
    %v692 = vld [vmem:[#allocation8 + $0x368] sm:$0xff]
    %v693 = vld [vmem:[#allocation8 + $0x370] sm:$0xff]
    %v694 = vld [vmem:[#allocation8 + $0x378] sm:$0xff]
    %v695 = vld [vmem:[#allocation8 + $0x380] sm:$0xff]
    %v696 = vld [vmem:[#allocation8 + $0x388] sm:$0xff]
    %v697 = vld [vmem:[#allocation8 + $0x390] sm:$0xff]
    %v698 = vld [vmem:[#allocation8 + $0x398] sm:$0xff]
    %v699 = vld [vmem:[#allocation8 + $0x3a0] sm:$0xff]
    %v700 = vld [vmem:[#allocation8 + $0x3a8] sm:$0xff]
    %v701 = vld [vmem:[#allocation8 + $0x3b0] sm:$0xff]
    %v702 = vld [vmem:[#allocation8 + $0x3b8] sm:$0xff]
    %v703 = vld [vmem:[#allocation8 + $0x3c0] sm:$0xff]
    %v704 = vld [vmem:[#allocation8 + $0x3c8] sm:$0xff]
    %v705 = vld [vmem:[#allocation8 + $0x3d0] sm:$0xff]
    %v706 = vld [vmem:[#allocation8 + $0x3d8] sm:$0xff]
    %v707 = vld [vmem:[#allocation8 + $0x3e0] sm:$0xff]
    %v708 = vld [vmem:[#allocation8 + $0x3e8] sm:$0xff]
    %v709 = vld [vmem:[#allocation8 + $0x3f0] sm:$0xff]
    %v710 = vld [vmem:[#allocation8 + $0x3f8] sm:$0xff]
    %v711 = vld [vmem:[#allocation8 + $0x400] sm:$0xff]
    %v712 = vld [vmem:[#allocation8 + $0x408] sm:$0xff]
    %v713 = vld [vmem:[#allocation8 + $0x410] sm:$0xff]
    %v714 = vld [vmem:[#allocation8 + $0x418] sm:$0xff]
    %v715 = vld [vmem:[#allocation8 + $0x420] sm:$0xff]
    %v716 = vld [vmem:[#allocation8 + $0x428] sm:$0xff]
    %v717 = vld [vmem:[#allocation8 + $0x430] sm:$0xff]
    %v718 = vld [vmem:[#allocation8 + $0x438] sm:$0xff]
    %v719 = vld [vmem:[#allocation8 + $0x440] sm:$0xff]
    %v720 = vld [vmem:[#allocation8 + $0x448] sm:$0xff]
    %v721 = vld [vmem:[#allocation8 + $0x450] sm:$0xff]
    %v722 = vld [vmem:[#allocation8 + $0x458] sm:$0xff]
    %v723 = vld [vmem:[#allocation8 + $0x460] sm:$0xff]
    %v724 = vld [vmem:[#allocation8 + $0x468] sm:$0xff]
    %v725 = vld [vmem:[#allocation8 + $0x470] sm:$0xff]
    %v726 = vld [vmem:[#allocation8 + $0x478] sm:$0xff]
    %v727 = vld [vmem:[#allocation8 + $0x480] sm:$0xff]
    %v728 = vld [vmem:[#allocation8 + $0x488] sm:$0xff]
    %v729 = vld [vmem:[#allocation8 + $0x490] sm:$0xff]
    %v730 = vld [vmem:[#allocation8 + $0x498] sm:$0xff]
    %v731 = vld [vmem:[#allocation8 + $0x4a0] sm:$0xff]
    %v732 = vld [vmem:[#allocation8 + $0x4a8] sm:$0xff]
    %v733 = vld [vmem:[#allocation8 + $0x4b0] sm:$0xff]
    %v734 = vld [vmem:[#allocation8 + $0x4b8] sm:$0xff]
    %v735 = vld [vmem:[#allocation8 + $0x4c0] sm:$0xff]
    %v736 = vld [vmem:[#allocation8 + $0x4c8] sm:$0xff]
    %v737 = vld [vmem:[#allocation8 + $0x4d0] sm:$0xff]
    %v738 = vld [vmem:[#allocation8 + $0x4d8] sm:$0xff]
    %v739 = vld [vmem:[#allocation8 + $0x4e0] sm:$0xff]
    %v740 = vld [vmem:[#allocation8 + $0x4e8] sm:$0xff]
    %v741 = vld [vmem:[#allocation8 + $0x4f0] sm:$0xff]
    %v742 = vld [vmem:[#allocation8 + $0x4f8] sm:$0xff]
    %v743 = vld [vmem:[#allocation8 + $0x500] sm:$0xff]
    %v744 = vld [vmem:[#allocation8 + $0x508] sm:$0xff]
    %v745 = vld [vmem:[#allocation8 + $0x510] sm:$0xff]
    %v746 = vld [vmem:[#allocation8 + $0x518] sm:$0xff]
    %v747 = vld [vmem:[#allocation8 + $0x520] sm:$0xff]
    %v748 = vld [vmem:[#allocation8 + $0x528] sm:$0xff]
    %v749 = vld [vmem:[#allocation8 + $0x530] sm:$0xff]
    %v750 = vld [vmem:[#allocation8 + $0x538] sm:$0xff]
    %v751 = vld [vmem:[#allocation8 + $0x540] sm:$0xff]
    %v752 = vld [vmem:[#allocation8 + $0x548] sm:$0xff]
    %v753 = vld [vmem:[#allocation8 + $0x550] sm:$0xff]
    %v754 = vld [vmem:[#allocation8 + $0x558] sm:$0xff]
    %v755 = vld [vmem:[#allocation8 + $0x560] sm:$0xff]
    %v756 = vld [vmem:[#allocation8 + $0x568] sm:$0xff]
    %v757 = vld [vmem:[#allocation8 + $0x570] sm:$0xff]
    %v758 = vld [vmem:[#allocation8 + $0x578] sm:$0xff]
    %v759 = vld [vmem:[#allocation8 + $0x580] sm:$0xff]
    %v760 = vld [vmem:[#allocation8 + $0x588] sm:$0xff]
    %v761 = vld [vmem:[#allocation8 + $0x590] sm:$0xff]
    %v762 = vld [vmem:[#allocation8 + $0x598] sm:$0xff]
    %v763 = vld [vmem:[#allocation8 + $0x5a0] sm:$0xff]
    %v764 = vld [vmem:[#allocation8 + $0x5a8] sm:$0xff]
    %v765 = vld [vmem:[#allocation8 + $0x5b0] sm:$0xff]
    %v766 = vld [vmem:[#allocation8 + $0x5b8] sm:$0xff]
    %v767 = vld [vmem:[#allocation8 + $0x5c0] sm:$0xff]
    %v768 = vld [vmem:[#allocation8 + $0x5c8] sm:$0xff]
    %v769 = vld [vmem:[#allocation8 + $0x5d0] sm:$0xff]
    %v770 = vld [vmem:[#allocation8 + $0x5d8] sm:$0xff]
    %v771 = vld [vmem:[#allocation8 + $0x5e0] sm:$0xff]
    %v772 = vld [vmem:[#allocation8 + $0x5e8] sm:$0xff]
    %v773 = vld [vmem:[#allocation8 + $0x5f0] sm:$0xff]
    %v774 = vld [vmem:[#allocation8 + $0x5f8] sm:$0xff]
    %v775 = vld [vmem:[#allocation10] sm:$0xf]
    %v777 = vlaneseq
    %v778 = vshrl.u32 %v777, 7
    %v779 = vsub.s32 0, %v778
    %v780 = vrot.slane %v775, %v779
    %v781 = vlaneseq
    %v782 = vshrl.u32 %v781, 7
    %v783 = vsub.s32 1, %v782
    %v784 = vrot.slane %v775, %v783
    %v785 = vlaneseq
    %v786 = vshrl.u32 %v785, 7
    %v787 = vsub.s32 2, %v786
    %v788 = vrot.slane %v775, %v787
    %v789 = vlaneseq
    %v790 = vshrl.u32 %v789, 7
    %v791 = vsub.s32 3, %v790
    %v792 = vrot.slane %v775, %v791
    %v989 = vunpack.c.l.b16 %v583
    %v990 = vunpack.c.h.b16 %v583
    %v991 = vunpack.c.l.b16 %v584
    %v992 = vunpack.c.h.b16 %v584
    %v993 = vunpack.c.l.b16 %v585
    %v994 = vunpack.c.h.b16 %v585
    %v995 = vunpack.c.l.b16 %v586
    %v996 = vunpack.c.h.b16 %v586
    %v997 = vunpack.c.l.b16 %v587
    %v998 = vunpack.c.h.b16 %v587
    %v999 = vunpack.c.l.b16 %v588
    %v1000 = vunpack.c.h.b16 %v588
    %v1001 = vunpack.c.l.b16 %v589
    %v1002 = vunpack.c.h.b16 %v589
    %v1003 = vunpack.c.l.b16 %v590
    %v1004 = vunpack.c.h.b16 %v590
    %v1005 = vunpack.c.l.b16 %v591
    %v1006 = vunpack.c.h.b16 %v591
    %v1007 = vunpack.c.l.b16 %v592
    %v1008 = vunpack.c.h.b16 %v592
    %v1009 = vunpack.c.l.b16 %v593
    %v1010 = vunpack.c.h.b16 %v593
    %v1011 = vunpack.c.l.b16 %v594
    %v1012 = vunpack.c.h.b16 %v594
    %v1013 = vunpack.c.l.b16 %v595
    %v1014 = vunpack.c.h.b16 %v595
    %v1015 = vunpack.c.l.b16 %v596
    %v1016 = vunpack.c.h.b16 %v596
    %v1017 = vunpack.c.l.b16 %v597
    %v1018 = vunpack.c.h.b16 %v597
    %v1019 = vunpack.c.l.b16 %v598
    %v1020 = vunpack.c.h.b16 %v598
    %v1021 = vunpack.c.l.b16 %v599
    %v1022 = vunpack.c.h.b16 %v599
    %v1023 = vunpack.c.l.b16 %v600
    %v1024 = vunpack.c.h.b16 %v600
    %v1025 = vunpack.c.l.b16 %v601
    %v1026 = vunpack.c.h.b16 %v601
    %v1027 = vunpack.c.l.b16 %v602
    %v1028 = vunpack.c.h.b16 %v602
    %v1029 = vunpack.c.l.b16 %v603
    %v1030 = vunpack.c.h.b16 %v603
    %v1031 = vunpack.c.l.b16 %v604
    %v1032 = vunpack.c.h.b16 %v604
    %v1033 = vunpack.c.l.b16 %v605
    %v1034 = vunpack.c.h.b16 %v605
    %v1035 = vunpack.c.l.b16 %v606
    %v1036 = vunpack.c.h.b16 %v606
    %v1037 = vunpack.c.l.b16 %v607
    %v1038 = vunpack.c.h.b16 %v607
    %v1039 = vunpack.c.l.b16 %v608
    %v1040 = vunpack.c.h.b16 %v608
    %v1041 = vunpack.c.l.b16 %v609
    %v1042 = vunpack.c.h.b16 %v609
    %v1043 = vunpack.c.l.b16 %v610
    %v1044 = vunpack.c.h.b16 %v610
    %v1045 = vunpack.c.l.b16 %v611
    %v1046 = vunpack.c.h.b16 %v611
    %v1047 = vunpack.c.l.b16 %v612
    %v1048 = vunpack.c.h.b16 %v612
    %v1049 = vunpack.c.l.b16 %v613
    %v1050 = vunpack.c.h.b16 %v613
    %v1051 = vunpack.c.l.b16 %v614
    %v1052 = vunpack.c.h.b16 %v614
    %v1053 = vunpack.c.l.b16 %v615
    %v1054 = vunpack.c.h.b16 %v615
    %v1055 = vunpack.c.l.b16 %v616
    %v1056 = vunpack.c.h.b16 %v616
    %v1057 = vunpack.c.l.b16 %v617
    %v1058 = vunpack.c.h.b16 %v617
    %v1059 = vunpack.c.l.b16 %v618
    %v1060 = vunpack.c.h.b16 %v618
    %v1061 = vunpack.c.l.b16 %v619
    %v1062 = vunpack.c.h.b16 %v619
    %v1063 = vunpack.c.l.b16 %v620
    %v1064 = vunpack.c.h.b16 %v620
    %v1065 = vunpack.c.l.b16 %v621
    %v1066 = vunpack.c.h.b16 %v621
    %v1067 = vunpack.c.l.b16 %v622
    %v1068 = vunpack.c.h.b16 %v622
    %v1069 = vunpack.c.l.b16 %v623
    %v1070 = vunpack.c.h.b16 %v623
    %v1071 = vunpack.c.l.b16 %v624
    %v1072 = vunpack.c.h.b16 %v624
    %v1073 = vunpack.c.l.b16 %v625
    %v1074 = vunpack.c.h.b16 %v625
    %v1075 = vunpack.c.l.b16 %v626
    %v1076 = vunpack.c.h.b16 %v626
    %v1077 = vunpack.c.l.b16 %v627
    %v1078 = vunpack.c.h.b16 %v627
    %v1079 = vunpack.c.l.b16 %v628
    %v1080 = vunpack.c.h.b16 %v628
    %v1081 = vunpack.c.l.b16 %v629
    %v1082 = vunpack.c.h.b16 %v629
    %v1083 = vunpack.c.l.b16 %v630
    %v1084 = vunpack.c.h.b16 %v630
    %v1085 = vunpack.c.l.b16 %v631
    %v1086 = vunpack.c.h.b16 %v631
    %v1087 = vunpack.c.l.b16 %v632
    %v1088 = vunpack.c.h.b16 %v632
    %v1089 = vunpack.c.l.b16 %v633
    %v1090 = vunpack.c.h.b16 %v633
    %v1091 = vunpack.c.l.b16 %v634
    %v1092 = vunpack.c.h.b16 %v634
    %v1093 = vunpack.c.l.b16 %v635
    %v1094 = vunpack.c.h.b16 %v635
    %v1095 = vunpack.c.l.b16 %v636
    %v1096 = vunpack.c.h.b16 %v636
    %v1097 = vunpack.c.l.b16 %v637
    %v1098 = vunpack.c.h.b16 %v637
    %v1099 = vunpack.c.l.b16 %v638
    %v1100 = vunpack.c.h.b16 %v638
    %v1101 = vunpack.c.l.b16 %v639
    %v1102 = vunpack.c.h.b16 %v639
    %v1103 = vunpack.c.l.b16 %v640
    %v1104 = vunpack.c.h.b16 %v640
    %v1105 = vunpack.c.l.b16 %v641
    %v1106 = vunpack.c.h.b16 %v641
    %v1107 = vunpack.c.l.b16 %v642
    %v1108 = vunpack.c.h.b16 %v642
    %v1109 = vunpack.c.l.b16 %v643
    %v1110 = vunpack.c.h.b16 %v643
    %v1111 = vunpack.c.l.b16 %v644
    %v1112 = vunpack.c.h.b16 %v644
    %v1113 = vunpack.c.l.b16 %v645
    %v1114 = vunpack.c.h.b16 %v645
    %v1115 = vunpack.c.l.b16 %v646
    %v1116 = vunpack.c.h.b16 %v646
    %v1117 = vunpack.c.l.b16 %v647
    %v1118 = vunpack.c.h.b16 %v647
    %v1119 = vunpack.c.l.b16 %v648
    %v1120 = vunpack.c.h.b16 %v648
    %v1121 = vunpack.c.l.b16 %v649
    %v1122 = vunpack.c.h.b16 %v649
    %v1123 = vunpack.c.l.b16 %v650
    %v1124 = vunpack.c.h.b16 %v650
    %v1125 = vunpack.c.l.b16 %v651
    %v1126 = vunpack.c.h.b16 %v651
    %v1127 = vunpack.c.l.b16 %v652
    %v1128 = vunpack.c.h.b16 %v652
    %v1129 = vunpack.c.l.b16 %v653
    %v1130 = vunpack.c.h.b16 %v653
    %v1131 = vunpack.c.l.b16 %v654
    %v1132 = vunpack.c.h.b16 %v654
    %v1133 = vunpack.c.l.b16 %v655
    %v1134 = vunpack.c.h.b16 %v655
    %v1135 = vunpack.c.l.b16 %v656
    %v1136 = vunpack.c.h.b16 %v656
    %v1137 = vunpack.c.l.b16 %v657
    %v1138 = vunpack.c.h.b16 %v657
    %v1139 = vunpack.c.l.b16 %v658
    %v1140 = vunpack.c.h.b16 %v658
    %v1141 = vunpack.c.l.b16 %v659
    %v1142 = vunpack.c.h.b16 %v659
    %v1143 = vunpack.c.l.b16 %v660
    %v1144 = vunpack.c.h.b16 %v660
    %v1145 = vunpack.c.l.b16 %v661
    %v1146 = vunpack.c.h.b16 %v661
    %v1147 = vunpack.c.l.b16 %v662
    %v1148 = vunpack.c.h.b16 %v662
    %v1149 = vunpack.c.l.b16 %v663
    %v1150 = vunpack.c.h.b16 %v663
    %v1151 = vunpack.c.l.b16 %v664
    %v1152 = vunpack.c.h.b16 %v664
    %v1153 = vunpack.c.l.b16 %v665
    %v1154 = vunpack.c.h.b16 %v665
    %v1155 = vunpack.c.l.b16 %v666
    %v1156 = vunpack.c.h.b16 %v666
    %v1157 = vunpack.c.l.b16 %v667
    %v1158 = vunpack.c.h.b16 %v667
    %v1159 = vunpack.c.l.b16 %v668
    %v1160 = vunpack.c.h.b16 %v668
    %v1161 = vunpack.c.l.b16 %v669
    %v1162 = vunpack.c.h.b16 %v669
    %v1163 = vunpack.c.l.b16 %v670
    %v1164 = vunpack.c.h.b16 %v670
    %v1165 = vunpack.c.l.b16 %v671
    %v1166 = vunpack.c.h.b16 %v671
    %v1167 = vunpack.c.l.b16 %v672
    %v1168 = vunpack.c.h.b16 %v672
    %v1169 = vunpack.c.l.b16 %v673
    %v1170 = vunpack.c.h.b16 %v673
    %v1171 = vunpack.c.l.b16 %v674
    %v1172 = vunpack.c.h.b16 %v674
    %v1173 = vunpack.c.l.b16 %v675
    %v1174 = vunpack.c.h.b16 %v675
    %v1175 = vunpack.c.l.b16 %v676
    %v1176 = vunpack.c.h.b16 %v676
    %v1177 = vunpack.c.l.b16 %v677
    %v1178 = vunpack.c.h.b16 %v677
    %v1179 = vunpack.c.l.b16 %v678
    %v1180 = vunpack.c.h.b16 %v678
    %v1181 = vunpack.c.l.b16 %v679
    %v1182 = vunpack.c.h.b16 %v679
    %v1183 = vunpack.c.l.b16 %v680
    %v1184 = vunpack.c.h.b16 %v680
    %v1185 = vunpack.c.l.b16 %v681
    %v1186 = vunpack.c.h.b16 %v681
    %v1187 = vunpack.c.l.b16 %v682
    %v1188 = vunpack.c.h.b16 %v682
    %v1189 = vunpack.c.l.b16 %v683
    %v1190 = vunpack.c.h.b16 %v683
    %v1191 = vunpack.c.l.b16 %v684
    %v1192 = vunpack.c.h.b16 %v684
    %v1193 = vunpack.c.l.b16 %v685
    %v1194 = vunpack.c.h.b16 %v685
    %v1195 = vunpack.c.l.b16 %v686
    %v1196 = vunpack.c.h.b16 %v686
    %v1197 = vunpack.c.l.b16 %v687
    %v1198 = vunpack.c.h.b16 %v687
    %v1199 = vunpack.c.l.b16 %v688
    %v1200 = vunpack.c.h.b16 %v688
    %v1201 = vunpack.c.l.b16 %v689
    %v1202 = vunpack.c.h.b16 %v689
    %v1203 = vunpack.c.l.b16 %v690
    %v1204 = vunpack.c.h.b16 %v690
    %v1205 = vunpack.c.l.b16 %v691
    %v1206 = vunpack.c.h.b16 %v691
    %v1207 = vunpack.c.l.b16 %v692
    %v1208 = vunpack.c.h.b16 %v692
    %v1209 = vunpack.c.l.b16 %v693
    %v1210 = vunpack.c.h.b16 %v693
    %v1211 = vunpack.c.l.b16 %v694
    %v1212 = vunpack.c.h.b16 %v694
    %v1213 = vunpack.c.l.b16 %v695
    %v1214 = vunpack.c.h.b16 %v695
    %v1215 = vunpack.c.l.b16 %v696
    %v1216 = vunpack.c.h.b16 %v696
    %v1217 = vunpack.c.l.b16 %v697
    %v1218 = vunpack.c.h.b16 %v697
    %v1219 = vunpack.c.l.b16 %v698
    %v1220 = vunpack.c.h.b16 %v698
    %v1221 = vunpack.c.l.b16 %v699
    %v1222 = vunpack.c.h.b16 %v699
    %v1223 = vunpack.c.l.b16 %v700
    %v1224 = vunpack.c.h.b16 %v700
    %v1225 = vunpack.c.l.b16 %v701
    %v1226 = vunpack.c.h.b16 %v701
    %v1227 = vunpack.c.l.b16 %v702
    %v1228 = vunpack.c.h.b16 %v702
    %v1229 = vunpack.c.l.b16 %v703
    %v1230 = vunpack.c.h.b16 %v703
    %v1231 = vunpack.c.l.b16 %v704
    %v1232 = vunpack.c.h.b16 %v704
    %v1233 = vunpack.c.l.b16 %v705
    %v1234 = vunpack.c.h.b16 %v705
    %v1235 = vunpack.c.l.b16 %v706
    %v1236 = vunpack.c.h.b16 %v706
    %v1237 = vunpack.c.l.b16 %v707
    %v1238 = vunpack.c.h.b16 %v707
    %v1239 = vunpack.c.l.b16 %v708
    %v1240 = vunpack.c.h.b16 %v708
    %v1241 = vunpack.c.l.b16 %v709
    %v1242 = vunpack.c.h.b16 %v709
    %v1243 = vunpack.c.l.b16 %v710
    %v1244 = vunpack.c.h.b16 %v710
    %v1245 = vunpack.c.l.b16 %v711
    %v1246 = vunpack.c.h.b16 %v711
    %v1247 = vunpack.c.l.b16 %v712
    %v1248 = vunpack.c.h.b16 %v712
    %v1249 = vunpack.c.l.b16 %v713
    %v1250 = vunpack.c.h.b16 %v713
    %v1251 = vunpack.c.l.b16 %v714
    %v1252 = vunpack.c.h.b16 %v714
    %v1253 = vunpack.c.l.b16 %v715
    %v1254 = vunpack.c.h.b16 %v715
    %v1255 = vunpack.c.l.b16 %v716
    %v1256 = vunpack.c.h.b16 %v716
    %v1257 = vunpack.c.l.b16 %v717
    %v1258 = vunpack.c.h.b16 %v717
    %v1259 = vunpack.c.l.b16 %v718
    %v1260 = vunpack.c.h.b16 %v718
    %v1261 = vunpack.c.l.b16 %v719
    %v1262 = vunpack.c.h.b16 %v719
    %v1263 = vunpack.c.l.b16 %v720
    %v1264 = vunpack.c.h.b16 %v720
    %v1265 = vunpack.c.l.b16 %v721
    %v1266 = vunpack.c.h.b16 %v721
    %v1267 = vunpack.c.l.b16 %v722
    %v1268 = vunpack.c.h.b16 %v722
    %v1269 = vunpack.c.l.b16 %v723
    %v1270 = vunpack.c.h.b16 %v723
    %v1271 = vunpack.c.l.b16 %v724
    %v1272 = vunpack.c.h.b16 %v724
    %v1273 = vunpack.c.l.b16 %v725
    %v1274 = vunpack.c.h.b16 %v725
    %v1275 = vunpack.c.l.b16 %v726
    %v1276 = vunpack.c.h.b16 %v726
    %v1277 = vunpack.c.l.b16 %v727
    %v1278 = vunpack.c.h.b16 %v727
    %v1279 = vunpack.c.l.b16 %v728
    %v1280 = vunpack.c.h.b16 %v728
    %v1281 = vunpack.c.l.b16 %v729
    %v1282 = vunpack.c.h.b16 %v729
    %v1283 = vunpack.c.l.b16 %v730
    %v1284 = vunpack.c.h.b16 %v730
    %v1285 = vunpack.c.l.b16 %v731
    %v1286 = vunpack.c.h.b16 %v731
    %v1287 = vunpack.c.l.b16 %v732
    %v1288 = vunpack.c.h.b16 %v732
    %v1289 = vunpack.c.l.b16 %v733
    %v1290 = vunpack.c.h.b16 %v733
    %v1291 = vunpack.c.l.b16 %v734
    %v1292 = vunpack.c.h.b16 %v734
    %v1293 = vunpack.c.l.b16 %v735
    %v1294 = vunpack.c.h.b16 %v735
    %v1295 = vunpack.c.l.b16 %v736
    %v1296 = vunpack.c.h.b16 %v736
    %v1297 = vunpack.c.l.b16 %v737
    %v1298 = vunpack.c.h.b16 %v737
    %v1299 = vunpack.c.l.b16 %v738
    %v1300 = vunpack.c.h.b16 %v738
    %v1301 = vunpack.c.l.b16 %v739
    %v1302 = vunpack.c.h.b16 %v739
    %v1303 = vunpack.c.l.b16 %v740
    %v1304 = vunpack.c.h.b16 %v740
    %v1305 = vunpack.c.l.b16 %v741
    %v1306 = vunpack.c.h.b16 %v741
    %v1307 = vunpack.c.l.b16 %v742
    %v1308 = vunpack.c.h.b16 %v742
    %v1309 = vunpack.c.l.b16 %v743
    %v1310 = vunpack.c.h.b16 %v743
    %v1311 = vunpack.c.l.b16 %v744
    %v1312 = vunpack.c.h.b16 %v744
    %v1313 = vunpack.c.l.b16 %v745
    %v1314 = vunpack.c.h.b16 %v745
    %v1315 = vunpack.c.l.b16 %v746
    %v1316 = vunpack.c.h.b16 %v746
    %v1317 = vunpack.c.l.b16 %v747
    %v1318 = vunpack.c.h.b16 %v747
    %v1319 = vunpack.c.l.b16 %v748
    %v1320 = vunpack.c.h.b16 %v748
    %v1321 = vunpack.c.l.b16 %v749
    %v1322 = vunpack.c.h.b16 %v749
    %v1323 = vunpack.c.l.b16 %v750
    %v1324 = vunpack.c.h.b16 %v750
    %v1325 = vunpack.c.l.b16 %v751
    %v1326 = vunpack.c.h.b16 %v751
    %v1327 = vunpack.c.l.b16 %v752
    %v1328 = vunpack.c.h.b16 %v752
    %v1329 = vunpack.c.l.b16 %v753
    %v1330 = vunpack.c.h.b16 %v753
    %v1331 = vunpack.c.l.b16 %v754
    %v1332 = vunpack.c.h.b16 %v754
    %v1333 = vunpack.c.l.b16 %v755
    %v1334 = vunpack.c.h.b16 %v755
    %v1335 = vunpack.c.l.b16 %v756
    %v1336 = vunpack.c.h.b16 %v756
    %v1337 = vunpack.c.l.b16 %v757
    %v1338 = vunpack.c.h.b16 %v757
    %v1339 = vunpack.c.l.b16 %v758
    %v1340 = vunpack.c.h.b16 %v758
    %v1341 = vunpack.c.l.b16 %v759
    %v1342 = vunpack.c.h.b16 %v759
    %v1343 = vunpack.c.l.b16 %v760
    %v1344 = vunpack.c.h.b16 %v760
    %v1345 = vunpack.c.l.b16 %v761
    %v1346 = vunpack.c.h.b16 %v761
    %v1347 = vunpack.c.l.b16 %v762
    %v1348 = vunpack.c.h.b16 %v762
    %v1349 = vunpack.c.l.b16 %v763
    %v1350 = vunpack.c.h.b16 %v763
    %v1351 = vunpack.c.l.b16 %v764
    %v1352 = vunpack.c.h.b16 %v764
    %v1353 = vunpack.c.l.b16 %v765
    %v1354 = vunpack.c.h.b16 %v765
    %v1355 = vunpack.c.l.b16 %v766
    %v1356 = vunpack.c.h.b16 %v766
    %v1357 = vunpack.c.l.b16 %v767
    %v1358 = vunpack.c.h.b16 %v767
    %v1359 = vunpack.c.l.b16 %v768
    %v1360 = vunpack.c.h.b16 %v768
    %v1361 = vunpack.c.l.b16 %v769
    %v1362 = vunpack.c.h.b16 %v769
    %v1363 = vunpack.c.l.b16 %v770
    %v1364 = vunpack.c.h.b16 %v770
    %v1365 = vunpack.c.l.b16 %v771
    %v1366 = vunpack.c.h.b16 %v771
    %v1367 = vunpack.c.l.b16 %v772
    %v1368 = vunpack.c.h.b16 %v772
    %v1369 = vunpack.c.l.b16 %v773
    %v1370 = vunpack.c.h.b16 %v773
    %v1371 = vunpack.c.l.b16 %v774
    %v1372 = vunpack.c.h.b16 %v774
    %v1373 = vpack.c.b16 %v993, %v989
    %v1374 = vpack.c.b16 %v994, %v990
    %v1375 = vpack.c.b16 %v995, %v991
    %v1376 = vpack.c.b16 %v996, %v992
    %v1377 = vpack.c.b16 %v1001, %v997
    %v1378 = vpack.c.b16 %v1002, %v998
    %v1379 = vpack.c.b16 %v1003, %v999
    %v1380 = vpack.c.b16 %v1004, %v1000
    %v1381 = vpack.c.b16 %v1009, %v1005
    %v1382 = vpack.c.b16 %v1010, %v1006
    %v1383 = vpack.c.b16 %v1011, %v1007
    %v1384 = vpack.c.b16 %v1012, %v1008
    %v1385 = vpack.c.b16 %v1017, %v1013
    %v1386 = vpack.c.b16 %v1018, %v1014
    %v1387 = vpack.c.b16 %v1019, %v1015
    %v1388 = vpack.c.b16 %v1020, %v1016
    %v1389 = vpack.c.b16 %v1025, %v1021
    %v1390 = vpack.c.b16 %v1026, %v1022
    %v1391 = vpack.c.b16 %v1027, %v1023
    %v1392 = vpack.c.b16 %v1028, %v1024
    %v1393 = vpack.c.b16 %v1033, %v1029
    %v1394 = vpack.c.b16 %v1034, %v1030
    %v1395 = vpack.c.b16 %v1035, %v1031
    %v1396 = vpack.c.b16 %v1036, %v1032
    %v1397 = vpack.c.b16 %v1041, %v1037
    %v1398 = vpack.c.b16 %v1042, %v1038
    %v1399 = vpack.c.b16 %v1043, %v1039
    %v1400 = vpack.c.b16 %v1044, %v1040
    %v1401 = vpack.c.b16 %v1049, %v1045
    %v1402 = vpack.c.b16 %v1050, %v1046
    %v1403 = vpack.c.b16 %v1051, %v1047
    %v1404 = vpack.c.b16 %v1052, %v1048
    %v1405 = vpack.c.b16 %v1057, %v1053
    %v1406 = vpack.c.b16 %v1058, %v1054
    %v1407 = vpack.c.b16 %v1059, %v1055
    %v1408 = vpack.c.b16 %v1060, %v1056
    %v1409 = vpack.c.b16 %v1065, %v1061
    %v1410 = vpack.c.b16 %v1066, %v1062
    %v1411 = vpack.c.b16 %v1067, %v1063
    %v1412 = vpack.c.b16 %v1068, %v1064
    %v1413 = vpack.c.b16 %v1073, %v1069
    %v1414 = vpack.c.b16 %v1074, %v1070
    %v1415 = vpack.c.b16 %v1075, %v1071
    %v1416 = vpack.c.b16 %v1076, %v1072
    %v1417 = vpack.c.b16 %v1081, %v1077
    %v1418 = vpack.c.b16 %v1082, %v1078
    %v1419 = vpack.c.b16 %v1083, %v1079
    %v1420 = vpack.c.b16 %v1084, %v1080
    %v1421 = vpack.c.b16 %v1089, %v1085
    %v1422 = vpack.c.b16 %v1090, %v1086
    %v1423 = vpack.c.b16 %v1091, %v1087
    %v1424 = vpack.c.b16 %v1092, %v1088
    %v1425 = vpack.c.b16 %v1097, %v1093
    %v1426 = vpack.c.b16 %v1098, %v1094
    %v1427 = vpack.c.b16 %v1099, %v1095
    %v1428 = vpack.c.b16 %v1100, %v1096
    %v1429 = vpack.c.b16 %v1105, %v1101
    %v1430 = vpack.c.b16 %v1106, %v1102
    %v1431 = vpack.c.b16 %v1107, %v1103
    %v1432 = vpack.c.b16 %v1108, %v1104
    %v1433 = vpack.c.b16 %v1113, %v1109
    %v1434 = vpack.c.b16 %v1114, %v1110
    %v1435 = vpack.c.b16 %v1115, %v1111
    %v1436 = vpack.c.b16 %v1116, %v1112
    %v1437 = vpack.c.b16 %v1121, %v1117
    %v1438 = vpack.c.b16 %v1122, %v1118
    %v1439 = vpack.c.b16 %v1123, %v1119
    %v1440 = vpack.c.b16 %v1124, %v1120
    %v1441 = vpack.c.b16 %v1129, %v1125
    %v1442 = vpack.c.b16 %v1130, %v1126
    %v1443 = vpack.c.b16 %v1131, %v1127
    %v1444 = vpack.c.b16 %v1132, %v1128
    %v1445 = vpack.c.b16 %v1137, %v1133
    %v1446 = vpack.c.b16 %v1138, %v1134
    %v1447 = vpack.c.b16 %v1139, %v1135
    %v1448 = vpack.c.b16 %v1140, %v1136
    %v1449 = vpack.c.b16 %v1145, %v1141
    %v1450 = vpack.c.b16 %v1146, %v1142
    %v1451 = vpack.c.b16 %v1147, %v1143
    %v1452 = vpack.c.b16 %v1148, %v1144
    %v1453 = vpack.c.b16 %v1153, %v1149
    %v1454 = vpack.c.b16 %v1154, %v1150
    %v1455 = vpack.c.b16 %v1155, %v1151
    %v1456 = vpack.c.b16 %v1156, %v1152
    %v1457 = vpack.c.b16 %v1161, %v1157
    %v1458 = vpack.c.b16 %v1162, %v1158
    %v1459 = vpack.c.b16 %v1163, %v1159
    %v1460 = vpack.c.b16 %v1164, %v1160
    %v1461 = vpack.c.b16 %v1169, %v1165
    %v1462 = vpack.c.b16 %v1170, %v1166
    %v1463 = vpack.c.b16 %v1171, %v1167
    %v1464 = vpack.c.b16 %v1172, %v1168
    %v1465 = vpack.c.b16 %v1177, %v1173
    %v1466 = vpack.c.b16 %v1178, %v1174
    %v1467 = vpack.c.b16 %v1179, %v1175
    %v1468 = vpack.c.b16 %v1180, %v1176
    %v1469 = vpack.c.b16 %v1185, %v1181
    %v1470 = vpack.c.b16 %v1186, %v1182
    %v1471 = vpack.c.b16 %v1187, %v1183
    %v1472 = vpack.c.b16 %v1188, %v1184
    %v1473 = vpack.c.b16 %v1193, %v1189
    %v1474 = vpack.c.b16 %v1194, %v1190
    %v1475 = vpack.c.b16 %v1195, %v1191
    %v1476 = vpack.c.b16 %v1196, %v1192
    %v1477 = vpack.c.b16 %v1201, %v1197
    %v1478 = vpack.c.b16 %v1202, %v1198
    %v1479 = vpack.c.b16 %v1203, %v1199
    %v1480 = vpack.c.b16 %v1204, %v1200
    %v1481 = vpack.c.b16 %v1209, %v1205
    %v1482 = vpack.c.b16 %v1210, %v1206
    %v1483 = vpack.c.b16 %v1211, %v1207
    %v1484 = vpack.c.b16 %v1212, %v1208
    %v1485 = vpack.c.b16 %v1217, %v1213
    %v1486 = vpack.c.b16 %v1218, %v1214
    %v1487 = vpack.c.b16 %v1219, %v1215
    %v1488 = vpack.c.b16 %v1220, %v1216
    %v1489 = vpack.c.b16 %v1225, %v1221
    %v1490 = vpack.c.b16 %v1226, %v1222
    %v1491 = vpack.c.b16 %v1227, %v1223
    %v1492 = vpack.c.b16 %v1228, %v1224
    %v1493 = vpack.c.b16 %v1233, %v1229
    %v1494 = vpack.c.b16 %v1234, %v1230
    %v1495 = vpack.c.b16 %v1235, %v1231
    %v1496 = vpack.c.b16 %v1236, %v1232
    %v1497 = vpack.c.b16 %v1241, %v1237
    %v1498 = vpack.c.b16 %v1242, %v1238
    %v1499 = vpack.c.b16 %v1243, %v1239
    %v1500 = vpack.c.b16 %v1244, %v1240
    %v1501 = vpack.c.b16 %v1249, %v1245
    %v1502 = vpack.c.b16 %v1250, %v1246
    %v1503 = vpack.c.b16 %v1251, %v1247
    %v1504 = vpack.c.b16 %v1252, %v1248
    %v1505 = vpack.c.b16 %v1257, %v1253
    %v1506 = vpack.c.b16 %v1258, %v1254
    %v1507 = vpack.c.b16 %v1259, %v1255
    %v1508 = vpack.c.b16 %v1260, %v1256
    %v1509 = vpack.c.b16 %v1265, %v1261
    %v1510 = vpack.c.b16 %v1266, %v1262
    %v1511 = vpack.c.b16 %v1267, %v1263
    %v1512 = vpack.c.b16 %v1268, %v1264
    %v1513 = vpack.c.b16 %v1273, %v1269
    %v1514 = vpack.c.b16 %v1274, %v1270
    %v1515 = vpack.c.b16 %v1275, %v1271
    %v1516 = vpack.c.b16 %v1276, %v1272
    %v1517 = vpack.c.b16 %v1281, %v1277
    %v1518 = vpack.c.b16 %v1282, %v1278
    %v1519 = vpack.c.b16 %v1283, %v1279
    %v1520 = vpack.c.b16 %v1284, %v1280
    %v1521 = vpack.c.b16 %v1289, %v1285
    %v1522 = vpack.c.b16 %v1290, %v1286
    %v1523 = vpack.c.b16 %v1291, %v1287
    %v1524 = vpack.c.b16 %v1292, %v1288
    %v1525 = vpack.c.b16 %v1297, %v1293
    %v1526 = vpack.c.b16 %v1298, %v1294
    %v1527 = vpack.c.b16 %v1299, %v1295
    %v1528 = vpack.c.b16 %v1300, %v1296
    %v1529 = vpack.c.b16 %v1305, %v1301
    %v1530 = vpack.c.b16 %v1306, %v1302
    %v1531 = vpack.c.b16 %v1307, %v1303
    %v1532 = vpack.c.b16 %v1308, %v1304
    %v1533 = vpack.c.b16 %v1313, %v1309
    %v1534 = vpack.c.b16 %v1314, %v1310
    %v1535 = vpack.c.b16 %v1315, %v1311
    %v1536 = vpack.c.b16 %v1316, %v1312
    %v1537 = vpack.c.b16 %v1321, %v1317
    %v1538 = vpack.c.b16 %v1322, %v1318
    %v1539 = vpack.c.b16 %v1323, %v1319
    %v1540 = vpack.c.b16 %v1324, %v1320
    %v1541 = vpack.c.b16 %v1329, %v1325
    %v1542 = vpack.c.b16 %v1330, %v1326
    %v1543 = vpack.c.b16 %v1331, %v1327
    %v1544 = vpack.c.b16 %v1332, %v1328
    %v1545 = vpack.c.b16 %v1337, %v1333
    %v1546 = vpack.c.b16 %v1338, %v1334
    %v1547 = vpack.c.b16 %v1339, %v1335
    %v1548 = vpack.c.b16 %v1340, %v1336
    %v1549 = vpack.c.b16 %v1345, %v1341
    %v1550 = vpack.c.b16 %v1346, %v1342
    %v1551 = vpack.c.b16 %v1347, %v1343
    %v1552 = vpack.c.b16 %v1348, %v1344
    %v1553 = vpack.c.b16 %v1353, %v1349
    %v1554 = vpack.c.b16 %v1354, %v1350
    %v1555 = vpack.c.b16 %v1355, %v1351
    %v1556 = vpack.c.b16 %v1356, %v1352
    %v1557 = vpack.c.b16 %v1361, %v1357
    %v1558 = vpack.c.b16 %v1362, %v1358
    %v1559 = vpack.c.b16 %v1363, %v1359
    %v1560 = vpack.c.b16 %v1364, %v1360
    %v1561 = vpack.c.b16 %v1369, %v1365
    %v1562 = vpack.c.b16 %v1370, %v1366
    %v1563 = vpack.c.b16 %v1371, %v1367
    %v1564 = vpack.c.b16 %v1372, %v1368
    %1757 = vmatprep.subr.bf16.mxu0 %v1374
    %1758 = vmatpush1.bf16.msra.mxu0 %v1373
    %1759 = vmatprep.subr.bf16.mxu0 %v1378
    %1760 = vmatpush1.bf16.msra.mxu0 %v1377
    %1761 = vmatprep.subr.bf16.mxu0 %v1382
    %1762 = vmatpush1.bf16.msra.mxu0 %v1381
    %1763 = vmatprep.subr.bf16.mxu0 %v1386
    %1764 = vmatpush1.bf16.msra.mxu0 %v1385
    %1765 = vmatprep.subr.bf16.mxu0 %v1390
    %1766 = vmatpush1.bf16.msra.mxu0 %v1389
    %1767 = vmatprep.subr.bf16.mxu0 %v1394
    %1768 = vmatpush1.bf16.msra.mxu0 %v1393
    %1769 = vmatprep.subr.bf16.mxu0 %v1398
    %1770 = vmatpush1.bf16.msra.mxu0 %v1397
    %1771 = vmatprep.subr.bf16.mxu0 %v1402
    %1772 = vmatpush1.bf16.msra.mxu0 %v1401
    %1773 = vmatprep.subr.bf16.mxu0 %v1406
    %1774 = vmatpush1.bf16.msra.mxu0 %v1405
    %1775 = vmatprep.subr.bf16.mxu0 %v1410
    %1776 = vmatpush1.bf16.msra.mxu0 %v1409
    %1777 = vmatprep.subr.bf16.mxu0 %v1414
    %1778 = vmatpush1.bf16.msra.mxu0 %v1413
    %1779 = vmatprep.subr.bf16.mxu0 %v1418
    %1780 = vmatpush1.bf16.msra.mxu0 %v1417
    %1781 = vmatprep.subr.bf16.mxu0 %v1422
    %1782 = vmatpush1.bf16.msra.mxu0 %v1421
    %1783 = vmatprep.subr.bf16.mxu0 %v1426
    %1784 = vmatpush1.bf16.msra.mxu0 %v1425
    %1785 = vmatprep.subr.bf16.mxu0 %v1430
    %1786 = vmatpush1.bf16.msra.mxu0 %v1429
    %1787 = vmatprep.subr.bf16.mxu0 %v1434
    %1788 = vmatpush1.bf16.msra.mxu0 %v1433
    %1789 = vmatprep.mubr.bf16.mxu0 %v578
    %1790 = vmatmul.mubr.bf16.gmra.mrb[0].mxu0 %v577
    %v1791 = vpop.f32.mrb[0].mxu0
    %v1792 = vadd.f32 %v780, %v1791
    %v1793 = vpop.f32.mrb[0].mxu0
    %v1794 = vadd.f32 %v784, %v1793
    %v1795 = vpop.f32.mrb[0].mxu0
    %v1796 = vpop.f32.mrb[0].mxu0
    %1797 = vdwg.mxu0
    %1798 = vmatprep.subr.bf16.mxu0 %v1438
    %1799 = vmatpush1.bf16.msra.mxu0 %v1437
    %1800 = vmatprep.subr.bf16.mxu0 %v1442
    %1801 = vmatpush1.bf16.msra.mxu0 %v1441
    %1802 = vmatprep.subr.bf16.mxu0 %v1446
    %1803 = vmatpush1.bf16.msra.mxu0 %v1445
    %1804 = vmatprep.subr.bf16.mxu0 %v1450
    %1805 = vmatpush1.bf16.msra.mxu0 %v1449
    %1806 = vmatprep.subr.bf16.mxu0 %v1454
    %1807 = vmatpush1.bf16.msra.mxu0 %v1453
    %1808 = vmatprep.subr.bf16.mxu0 %v1458
    %1809 = vmatpush1.bf16.msra.mxu0 %v1457
    %1810 = vmatprep.subr.bf16.mxu0 %v1462
    %1811 = vmatpush1.bf16.msra.mxu0 %v1461
    %1812 = vmatprep.subr.bf16.mxu0 %v1466
    %1813 = vmatpush1.bf16.msra.mxu0 %v1465
    %1814 = vmatprep.subr.bf16.mxu0 %v1470
    %1815 = vmatpush1.bf16.msra.mxu0 %v1469
    %1816 = vmatprep.subr.bf16.mxu0 %v1474
    %1817 = vmatpush1.bf16.msra.mxu0 %v1473
    %1818 = vmatprep.subr.bf16.mxu0 %v1478
    %1819 = vmatpush1.bf16.msra.mxu0 %v1477
    %1820 = vmatprep.subr.bf16.mxu0 %v1482
    %1821 = vmatpush1.bf16.msra.mxu0 %v1481
    %1822 = vmatprep.subr.bf16.mxu0 %v1486
    %1823 = vmatpush1.bf16.msra.mxu0 %v1485
    %1824 = vmatprep.subr.bf16.mxu0 %v1490
    %1825 = vmatpush1.bf16.msra.mxu0 %v1489
    %1826 = vmatprep.subr.bf16.mxu0 %v1494
    %1827 = vmatpush1.bf16.msra.mxu0 %v1493
    %1828 = vmatprep.subr.bf16.mxu0 %v1498
    %1829 = vmatpush1.bf16.msra.mxu0 %v1497
    %1830 = vmatprep.mubr.bf16.mxu0 %v580
    %1831 = vmatmul.mubr.bf16.gmra.mrb[0].mxu0 %v579
    %v1832 = vpop.f32.mrb[0].mxu0
    %v1833 = vadd.f32 %v1792, %v1832
    %v1834 = vpop.f32.mrb[0].mxu0
    %v1835 = vadd.f32 %v1794, %v1834
    %v1836 = vpop.f32.mrb[0].mxu0
    %v1837 = vpop.f32.mrb[0].mxu0
    %1838 = vdwg.mxu0
    %1839 = vmatprep.subr.bf16.mxu0 %v1502
    %1840 = vmatpush1.bf16.msra.mxu0 %v1501
    %1841 = vmatprep.subr.bf16.mxu0 %v1506
    %1842 = vmatpush1.bf16.msra.mxu0 %v1505
    %1843 = vmatprep.subr.bf16.mxu0 %v1510
    %1844 = vmatpush1.bf16.msra.mxu0 %v1509
    %1845 = vmatprep.subr.bf16.mxu0 %v1514
    %1846 = vmatpush1.bf16.msra.mxu0 %v1513
    %1847 = vmatprep.subr.bf16.mxu0 %v1518
    %1848 = vmatpush1.bf16.msra.mxu0 %v1517
    %1849 = vmatprep.subr.bf16.mxu0 %v1522
    %1850 = vmatpush1.bf16.msra.mxu0 %v1521
    %1851 = vmatprep.subr.bf16.mxu0 %v1526
    %1852 = vmatpush1.bf16.msra.mxu0 %v1525
    %1853 = vmatprep.subr.bf16.mxu0 %v1530
    %1854 = vmatpush1.bf16.msra.mxu0 %v1529
    %1855 = vmatprep.subr.bf16.mxu0 %v1534
    %1856 = vmatpush1.bf16.msra.mxu0 %v1533
    %1857 = vmatprep.subr.bf16.mxu0 %v1538
    %1858 = vmatpush1.bf16.msra.mxu0 %v1537
    %1859 = vmatprep.subr.bf16.mxu0 %v1542
    %1860 = vmatpush1.bf16.msra.mxu0 %v1541
    %1861 = vmatprep.subr.bf16.mxu0 %v1546
    %1862 = vmatpush1.bf16.msra.mxu0 %v1545
    %1863 = vmatprep.subr.bf16.mxu0 %v1550
    %1864 = vmatpush1.bf16.msra.mxu0 %v1549
    %1865 = vmatprep.subr.bf16.mxu0 %v1554
    %1866 = vmatpush1.bf16.msra.mxu0 %v1553
    %1867 = vmatprep.subr.bf16.mxu0 %v1558
    %1868 = vmatpush1.bf16.msra.mxu0 %v1557
    %1869 = vmatprep.subr.bf16.mxu0 %v1562
    %1870 = vmatpush1.bf16.msra.mxu0 %v1561
    %1871 = vmatprep.mubr.bf16.mxu0 %v582
    %1872 = vmatmul.mubr.bf16.gmra.mrb[0].mxu0 %v581
    %v1873 = vpop.f32.mrb[0].mxu0
    %v1874 = vadd.f32 %v1833, %v1873
    %v1875 = vpop.f32.mrb[0].mxu0
    %v1876 = vadd.f32 %v1835, %v1875
    %v1877 = vpop.f32.mrb[0].mxu0
    %v1878 = vpop.f32.mrb[0].mxu0
    %1879 = vdwg.mxu0
    %1880 = vmatprep.subr.bf16.mxu0 %v1376
    %1881 = vmatpush1.bf16.msra.mxu0 %v1375
    %1882 = vmatprep.subr.bf16.mxu0 %v1380
    %1883 = vmatpush1.bf16.msra.mxu0 %v1379
    %1884 = vmatprep.subr.bf16.mxu0 %v1384
    %1885 = vmatpush1.bf16.msra.mxu0 %v1383
    %1886 = vmatprep.subr.bf16.mxu0 %v1388
    %1887 = vmatpush1.bf16.msra.mxu0 %v1387
    %1888 = vmatprep.subr.bf16.mxu0 %v1392
    %1889 = vmatpush1.bf16.msra.mxu0 %v1391
    %1890 = vmatprep.subr.bf16.mxu0 %v1396
    %1891 = vmatpush1.bf16.msra.mxu0 %v1395
    %1892 = vmatprep.subr.bf16.mxu0 %v1400
    %1893 = vmatpush1.bf16.msra.mxu0 %v1399
    %1894 = vmatprep.subr.bf16.mxu0 %v1404
    %1895 = vmatpush1.bf16.msra.mxu0 %v1403
    %1896 = vmatprep.subr.bf16.mxu0 %v1408
    %1897 = vmatpush1.bf16.msra.mxu0 %v1407
    %1898 = vmatprep.subr.bf16.mxu0 %v1412
    %1899 = vmatpush1.bf16.msra.mxu0 %v1411
    %1900 = vmatprep.subr.bf16.mxu0 %v1416
    %1901 = vmatpush1.bf16.msra.mxu0 %v1415
    %1902 = vmatprep.subr.bf16.mxu0 %v1420
    %1903 = vmatpush1.bf16.msra.mxu0 %v1419
    %1904 = vmatprep.subr.bf16.mxu0 %v1424
    %1905 = vmatpush1.bf16.msra.mxu0 %v1423
    %1906 = vmatprep.subr.bf16.mxu0 %v1428
    %1907 = vmatpush1.bf16.msra.mxu0 %v1427
    %1908 = vmatprep.subr.bf16.mxu0 %v1432
    %1909 = vmatpush1.bf16.msra.mxu0 %v1431
    %1910 = vmatprep.subr.bf16.mxu0 %v1436
    %1911 = vmatpush1.bf16.msra.mxu0 %v1435
    %1912 = vmatprep.mubr.bf16.mxu0 %v578
    %1913 = vmatmul.mubr.bf16.gmra.mrb[0].mxu0 %v577
    %v1914 = vpop.f32.mrb[0].mxu0
    %v1915 = vadd.f32 %v788, %v1914
    %v1916 = vpop.f32.mrb[0].mxu0
    %v1917 = vadd.f32 %v792, %v1916
    %v1918 = vpop.f32.mrb[0].mxu0
    %v1919 = vpop.f32.mrb[0].mxu0
    %1920 = vdwg.mxu0
    %1921 = vmatprep.subr.bf16.mxu0 %v1440
    %1922 = vmatpush1.bf16.msra.mxu0 %v1439
    %1923 = vmatprep.subr.bf16.mxu0 %v1444
    %1924 = vmatpush1.bf16.msra.mxu0 %v1443
    %1925 = vmatprep.subr.bf16.mxu0 %v1448
    %1926 = vmatpush1.bf16.msra.mxu0 %v1447
    %1927 = vmatprep.subr.bf16.mxu0 %v1452
    %1928 = vmatpush1.bf16.msra.mxu0 %v1451
    %1929 = vmatprep.subr.bf16.mxu0 %v1456
    %1930 = vmatpush1.bf16.msra.mxu0 %v1455
    %1931 = vmatprep.subr.bf16.mxu0 %v1460
    %1932 = vmatpush1.bf16.msra.mxu0 %v1459
    %1933 = vmatprep.subr.bf16.mxu0 %v1464
    %1934 = vmatpush1.bf16.msra.mxu0 %v1463
    %1935 = vmatprep.subr.bf16.mxu0 %v1468
    %1936 = vmatpush1.bf16.msra.mxu0 %v1467
    %1937 = vmatprep.subr.bf16.mxu0 %v1472
    %1938 = vmatpush1.bf16.msra.mxu0 %v1471
    %1939 = vmatprep.subr.bf16.mxu0 %v1476
    %1940 = vmatpush1.bf16.msra.mxu0 %v1475
    %1941 = vmatprep.subr.bf16.mxu0 %v1480
    %1942 = vmatpush1.bf16.msra.mxu0 %v1479
    %1943 = vmatprep.subr.bf16.mxu0 %v1484
    %1944 = vmatpush1.bf16.msra.mxu0 %v1483
    %1945 = vmatprep.subr.bf16.mxu0 %v1488
    %1946 = vmatpush1.bf16.msra.mxu0 %v1487
    %1947 = vmatprep.subr.bf16.mxu0 %v1492
    %1948 = vmatpush1.bf16.msra.mxu0 %v1491
    %1949 = vmatprep.subr.bf16.mxu0 %v1496
    %1950 = vmatpush1.bf16.msra.mxu0 %v1495
    %1951 = vmatprep.subr.bf16.mxu0 %v1500
    %1952 = vmatpush1.bf16.msra.mxu0 %v1499
    %1953 = vmatprep.mubr.bf16.mxu0 %v580
    %1954 = vmatmul.mubr.bf16.gmra.mrb[0].mxu0 %v579
    %v1955 = vpop.f32.mrb[0].mxu0
    %v1956 = vadd.f32 %v1915, %v1955
    %v1957 = vpop.f32.mrb[0].mxu0
    %v1958 = vadd.f32 %v1917, %v1957
    %v1959 = vpop.f32.mrb[0].mxu0
    %v1960 = vpop.f32.mrb[0].mxu0
    %1961 = vdwg.mxu0
    %1962 = vmatprep.subr.bf16.mxu0 %v1504
    %1963 = vmatpush1.bf16.msra.mxu0 %v1503
    %1964 = vmatprep.subr.bf16.mxu0 %v1508
    %1965 = vmatpush1.bf16.msra.mxu0 %v1507
    %1966 = vmatprep.subr.bf16.mxu0 %v1512
    %1967 = vmatpush1.bf16.msra.mxu0 %v1511
    %1968 = vmatprep.subr.bf16.mxu0 %v1516
    %1969 = vmatpush1.bf16.msra.mxu0 %v1515
    %1970 = vmatprep.subr.bf16.mxu0 %v1520
    %1971 = vmatpush1.bf16.msra.mxu0 %v1519
    %1972 = vmatprep.subr.bf16.mxu0 %v1524
    %1973 = vmatpush1.bf16.msra.mxu0 %v1523
    %1974 = vmatprep.subr.bf16.mxu0 %v1528
    %1975 = vmatpush1.bf16.msra.mxu0 %v1527
    %1976 = vmatprep.subr.bf16.mxu0 %v1532
    %1977 = vmatpush1.bf16.msra.mxu0 %v1531
    %1978 = vmatprep.subr.bf16.mxu0 %v1536
    %1979 = vmatpush1.bf16.msra.mxu0 %v1535
    %1980 = vmatprep.subr.bf16.mxu0 %v1540
    %1981 = vmatpush1.bf16.msra.mxu0 %v1539
    %1982 = vmatprep.subr.bf16.mxu0 %v1544
    %1983 = vmatpush1.bf16.msra.mxu0 %v1543
    %1984 = vmatprep.subr.bf16.mxu0 %v1548
    %1985 = vmatpush1.bf16.msra.mxu0 %v1547
    %1986 = vmatprep.subr.bf16.mxu0 %v1552
    %1987 = vmatpush1.bf16.msra.mxu0 %v1551
    %1988 = vmatprep.subr.bf16.mxu0 %v1556
    %1989 = vmatpush1.bf16.msra.mxu0 %v1555
    %1990 = vmatprep.subr.bf16.mxu0 %v1560
    %1991 = vmatpush1.bf16.msra.mxu0 %v1559
    %1992 = vmatprep.subr.bf16.mxu0 %v1564
    %1993 = vmatpush1.bf16.msra.mxu0 %v1563
    %1994 = vmatprep.mubr.bf16.mxu0 %v582
    %1995 = vmatmul.mubr.bf16.gmra.mrb[0].mxu0 %v581
    %v1996 = vpop.f32.mrb[0].mxu0
    %v1997 = vadd.f32 %v1956, %v1996
    %v1998 = vpop.f32.mrb[0].mxu0
    %v1999 = vadd.f32 %v1958, %v1998
    %v2000 = vpop.f32.mrb[0].mxu0
    %v2001 = vpop.f32.mrb[0].mxu0
    %2002 = vdwg.mxu0
    %v2003 = vtanh.pop %v1874
    %v2004 = vtanh.pop %v1876
    %v2005 = vtanh.pop %v1997
    %v2006 = vtanh.pop %v1999
    %v2007 = vmul.f32 %v2003, 0.5
    %v2008 = vmul.f32 %v2004, 0.5
    %v2009 = vmul.f32 %v2005, 0.5
    %v2010 = vmul.f32 %v2006, 0.5
    %v2011 = vadd.f32 %v2007, 0.5
    %v2012 = vadd.f32 %v2008, 0.5
    %v2013 = vadd.f32 %v2009, 0.5
    %v2014 = vadd.f32 %v2010, 0.5
    %v2015 = vpack.c.bf16 %v2011, %v2011
    %v2016 = vpack.c.bf16 %v2012, %v2012
    %v2017 = vpack.c.bf16 %v2013, %v2013
    %v2018 = vpack.c.bf16 %v2014, %v2014
    %v2019 = vld [vmem:[#allocation11] sm:$0xf]
    %v2020 = vld [vmem:[#allocation11 + $0x4] sm:$0xf]
    %v2021 = vld [vmem:[#allocation11 + $0x8] sm:$0xf]
    %v2022 = vld [vmem:[#allocation11 + $0xc] sm:$0xf]
    %v2023 = vld [vmem:[#allocation11 + $0x10] sm:$0xf]
    %v2024 = vld [vmem:[#allocation11 + $0x14] sm:$0xf]
    %v2025 = vld [vmem:[#allocation11 + $0x18] sm:$0xf]
    %v2026 = vld [vmem:[#allocation11 + $0x1c] sm:$0xf]
    %v2027 = vld [vmem:[#allocation11 + $0x20] sm:$0xf]
    %v2028 = vld [vmem:[#allocation11 + $0x24] sm:$0xf]
    %v2029 = vld [vmem:[#allocation11 + $0x28] sm:$0xf]
    %v2030 = vld [vmem:[#allocation11 + $0x2c] sm:$0xf]
    %v2031 = vld [vmem:[#allocation11 + $0x30] sm:$0xf]
    %v2032 = vld [vmem:[#allocation11 + $0x34] sm:$0xf]
    %v2033 = vld [vmem:[#allocation11 + $0x38] sm:$0xf]
    %v2034 = vld [vmem:[#allocation11 + $0x3c] sm:$0xf]
    %v2035 = vld [vmem:[#allocation11 + $0x40] sm:$0xf]
    %v2036 = vld [vmem:[#allocation11 + $0x44] sm:$0xf]
    %v2037 = vld [vmem:[#allocation11 + $0x48] sm:$0xf]
    %v2038 = vld [vmem:[#allocation11 + $0x4c] sm:$0xf]
    %v2039 = vld [vmem:[#allocation11 + $0x50] sm:$0xf]
    %v2040 = vld [vmem:[#allocation11 + $0x54] sm:$0xf]
    %v2041 = vld [vmem:[#allocation11 + $0x58] sm:$0xf]
    %v2042 = vld [vmem:[#allocation11 + $0x5c] sm:$0xf]
    %v2043 = vld [vmem:[#allocation11 + $0x60] sm:$0xf]
    %v2044 = vld [vmem:[#allocation11 + $0x64] sm:$0xf]
    %v2045 = vld [vmem:[#allocation11 + $0x68] sm:$0xf]
    %v2046 = vld [vmem:[#allocation11 + $0x6c] sm:$0xf]
    %v2047 = vld [vmem:[#allocation11 + $0x70] sm:$0xf]
    %v2048 = vld [vmem:[#allocation11 + $0x74] sm:$0xf]
    %v2049 = vld [vmem:[#allocation11 + $0x78] sm:$0xf]
    %v2050 = vld [vmem:[#allocation11 + $0x7c] sm:$0xf]
    %v2051 = vld [vmem:[#allocation11 + $0x80] sm:$0xf]
    %v2052 = vld [vmem:[#allocation11 + $0x84] sm:$0xf]
    %v2053 = vld [vmem:[#allocation11 + $0x88] sm:$0xf]
    %v2054 = vld [vmem:[#allocation11 + $0x8c] sm:$0xf]
    %v2055 = vld [vmem:[#allocation11 + $0x90] sm:$0xf]
    %v2056 = vld [vmem:[#allocation11 + $0x94] sm:$0xf]
    %v2057 = vld [vmem:[#allocation11 + $0x98] sm:$0xf]
    %v2058 = vld [vmem:[#allocation11 + $0x9c] sm:$0xf]
    %v2059 = vld [vmem:[#allocation11 + $0xa0] sm:$0xf]
    %v2060 = vld [vmem:[#allocation11 + $0xa4] sm:$0xf]
    %v2061 = vld [vmem:[#allocation11 + $0xa8] sm:$0xf]
    %v2062 = vld [vmem:[#allocation11 + $0xac] sm:$0xf]
    %v2063 = vld [vmem:[#allocation11 + $0xb0] sm:$0xf]
    %v2064 = vld [vmem:[#allocation11 + $0xb4] sm:$0xf]
    %v2065 = vld [vmem:[#allocation11 + $0xb8] sm:$0xf]
    %v2066 = vld [vmem:[#allocation11 + $0xbc] sm:$0xf]
    %v2067 = vld [vmem:[#allocation11 + $0xc0] sm:$0xf]
    %v2068 = vld [vmem:[#allocation11 + $0xc4] sm:$0xf]
    %v2069 = vld [vmem:[#allocation11 + $0xc8] sm:$0xf]
    %v2070 = vld [vmem:[#allocation11 + $0xcc] sm:$0xf]
    %v2071 = vld [vmem:[#allocation11 + $0xd0] sm:$0xf]
    %v2072 = vld [vmem:[#allocation11 + $0xd4] sm:$0xf]
    %v2073 = vld [vmem:[#allocation11 + $0xd8] sm:$0xf]
    %v2074 = vld [vmem:[#allocation11 + $0xdc] sm:$0xf]
    %v2075 = vld [vmem:[#allocation11 + $0xe0] sm:$0xf]
    %v2076 = vld [vmem:[#allocation11 + $0xe4] sm:$0xf]
    %v2077 = vld [vmem:[#allocation11 + $0xe8] sm:$0xf]
    %v2078 = vld [vmem:[#allocation11 + $0xec] sm:$0xf]
    %v2079 = vld [vmem:[#allocation11 + $0xf0] sm:$0xf]
    %v2080 = vld [vmem:[#allocation11 + $0xf4] sm:$0xf]
    %v2081 = vld [vmem:[#allocation11 + $0xf8] sm:$0xf]
    %v2082 = vld [vmem:[#allocation11 + $0xfc] sm:$0xf]
    %v2083 = vld [vmem:[#allocation13] sm:$0x1]
    %v2085 = vlaneseq
    %v2086 = vshrl.u32 %v2085, 7
    %v2087 = vsub.s32 0, %v2086
    %v2088 = vrot.slane %v2083, %v2087
    %v2154 = vunpack.c.l.b16 %v2019
    %v2155 = vunpack.c.l.b16 %v2020
    %v2156 = vunpack.c.l.b16 %v2021
    %v2157 = vunpack.c.l.b16 %v2022
    %v2158 = vunpack.c.l.b16 %v2023
    %v2159 = vunpack.c.l.b16 %v2024
    %v2160 = vunpack.c.l.b16 %v2025
    %v2161 = vunpack.c.l.b16 %v2026
    %v2162 = vunpack.c.l.b16 %v2027
    %v2163 = vunpack.c.l.b16 %v2028
    %v2164 = vunpack.c.l.b16 %v2029
    %v2165 = vunpack.c.l.b16 %v2030
    %v2166 = vunpack.c.l.b16 %v2031
    %v2167 = vunpack.c.l.b16 %v2032
    %v2168 = vunpack.c.l.b16 %v2033
    %v2169 = vunpack.c.l.b16 %v2034
    %v2170 = vunpack.c.l.b16 %v2035
    %v2171 = vunpack.c.l.b16 %v2036
    %v2172 = vunpack.c.l.b16 %v2037
    %v2173 = vunpack.c.l.b16 %v2038
    %v2174 = vunpack.c.l.b16 %v2039
    %v2175 = vunpack.c.l.b16 %v2040
    %v2176 = vunpack.c.l.b16 %v2041
    %v2177 = vunpack.c.l.b16 %v2042
    %v2178 = vunpack.c.l.b16 %v2043
    %v2179 = vunpack.c.l.b16 %v2044
    %v2180 = vunpack.c.l.b16 %v2045
    %v2181 = vunpack.c.l.b16 %v2046
    %v2182 = vunpack.c.l.b16 %v2047
    %v2183 = vunpack.c.l.b16 %v2048
    %v2184 = vunpack.c.l.b16 %v2049
    %v2185 = vunpack.c.l.b16 %v2050
    %v2186 = vunpack.c.l.b16 %v2051
    %v2187 = vunpack.c.l.b16 %v2052
    %v2188 = vunpack.c.l.b16 %v2053
    %v2189 = vunpack.c.l.b16 %v2054
    %v2190 = vunpack.c.l.b16 %v2055
    %v2191 = vunpack.c.l.b16 %v2056
    %v2192 = vunpack.c.l.b16 %v2057
    %v2193 = vunpack.c.l.b16 %v2058
    %v2194 = vunpack.c.l.b16 %v2059
    %v2195 = vunpack.c.l.b16 %v2060
    %v2196 = vunpack.c.l.b16 %v2061
    %v2197 = vunpack.c.l.b16 %v2062
    %v2198 = vunpack.c.l.b16 %v2063
    %v2199 = vunpack.c.l.b16 %v2064
    %v2200 = vunpack.c.l.b16 %v2065
    %v2201 = vunpack.c.l.b16 %v2066
    %v2202 = vunpack.c.l.b16 %v2067
    %v2203 = vunpack.c.l.b16 %v2068
    %v2204 = vunpack.c.l.b16 %v2069
    %v2205 = vunpack.c.l.b16 %v2070
    %v2206 = vunpack.c.l.b16 %v2071
    %v2207 = vunpack.c.l.b16 %v2072
    %v2208 = vunpack.c.l.b16 %v2073
    %v2209 = vunpack.c.l.b16 %v2074
    %v2210 = vunpack.c.l.b16 %v2075
    %v2211 = vunpack.c.l.b16 %v2076
    %v2212 = vunpack.c.l.b16 %v2077
    %v2213 = vunpack.c.l.b16 %v2078
    %v2214 = vunpack.c.l.b16 %v2079
    %v2215 = vunpack.c.l.b16 %v2080
    %v2216 = vunpack.c.l.b16 %v2081
    %v2217 = vunpack.c.l.b16 %v2082
    %v2218 = vpack.c.b16 %v2155, %v2154
    %v2219 = vpack.c.b16 %v2157, %v2156
    %v2220 = vpack.c.b16 %v2159, %v2158
    %v2221 = vpack.c.b16 %v2161, %v2160
    %v2222 = vpack.c.b16 %v2163, %v2162
    %v2223 = vpack.c.b16 %v2165, %v2164
    %v2224 = vpack.c.b16 %v2167, %v2166
    %v2225 = vpack.c.b16 %v2169, %v2168
    %v2226 = vpack.c.b16 %v2171, %v2170
    %v2227 = vpack.c.b16 %v2173, %v2172
    %v2228 = vpack.c.b16 %v2175, %v2174
    %v2229 = vpack.c.b16 %v2177, %v2176
    %v2230 = vpack.c.b16 %v2179, %v2178
    %v2231 = vpack.c.b16 %v2181, %v2180
    %v2232 = vpack.c.b16 %v2183, %v2182
    %v2233 = vpack.c.b16 %v2185, %v2184
    %v2234 = vpack.c.b16 %v2187, %v2186
    %v2235 = vpack.c.b16 %v2189, %v2188
    %v2236 = vpack.c.b16 %v2191, %v2190
    %v2237 = vpack.c.b16 %v2193, %v2192
    %v2238 = vpack.c.b16 %v2195, %v2194
    %v2239 = vpack.c.b16 %v2197, %v2196
    %v2240 = vpack.c.b16 %v2199, %v2198
    %v2241 = vpack.c.b16 %v2201, %v2200
    %v2242 = vpack.c.b16 %v2203, %v2202
    %v2243 = vpack.c.b16 %v2205, %v2204
    %v2244 = vpack.c.b16 %v2207, %v2206
    %v2245 = vpack.c.b16 %v2209, %v2208
    %v2246 = vpack.c.b16 %v2211, %v2210
    %v2247 = vpack.c.b16 %v2213, %v2212
    %v2248 = vpack.c.b16 %v2215, %v2214
    %v2249 = vpack.c.b16 %v2217, %v2216
    %2282 = vmatprep.subr.bf16.mxu0 0
    %2283 = vmatpush1.bf16.msra.mxu0 %v2218
    %2284 = vmatprep.subr.bf16.mxu0 0
    %2285 = vmatpush1.bf16.msra.mxu0 %v2219
    %2286 = vmatprep.subr.bf16.mxu0 0
    %2287 = vmatpush1.bf16.msra.mxu0 %v2220
    %2288 = vmatprep.subr.bf16.mxu0 0
    %2289 = vmatpush1.bf16.msra.mxu0 %v2221
    %2290 = vmatprep.subr.bf16.mxu0 0
    %2291 = vmatpush1.bf16.msra.mxu0 %v2222
    %2292 = vmatprep.subr.bf16.mxu0 0
    %2293 = vmatpush1.bf16.msra.mxu0 %v2223
    %2294 = vmatprep.subr.bf16.mxu0 0
    %2295 = vmatpush1.bf16.msra.mxu0 %v2224
    %2296 = vmatprep.subr.bf16.mxu0 0
    %2297 = vmatpush1.bf16.msra.mxu0 %v2225
    %2298 = vmatprep.subr.bf16.mxu0 0
    %2299 = vmatpush1.bf16.msra.mxu0 %v2226
    %2300 = vmatprep.subr.bf16.mxu0 0
    %2301 = vmatpush1.bf16.msra.mxu0 %v2227
    %2302 = vmatprep.subr.bf16.mxu0 0
    %2303 = vmatpush1.bf16.msra.mxu0 %v2228
    %2304 = vmatprep.subr.bf16.mxu0 0
    %2305 = vmatpush1.bf16.msra.mxu0 %v2229
    %2306 = vmatprep.subr.bf16.mxu0 0
    %2307 = vmatpush1.bf16.msra.mxu0 %v2230
    %2308 = vmatprep.subr.bf16.mxu0 0
    %2309 = vmatpush1.bf16.msra.mxu0 %v2231
    %2310 = vmatprep.subr.bf16.mxu0 0
    %2311 = vmatpush1.bf16.msra.mxu0 %v2232
    %2312 = vmatprep.subr.bf16.mxu0 0
    %2313 = vmatpush1.bf16.msra.mxu0 %v2233
    %2314 = vmatprep.mubr.bf16.mxu0 %v2016
    %2315 = vmatmul.mubr.bf16.gmra.mrb[0].mxu0 %v2015
    %v2316 = vpop.f32.mrb[0].mxu0
    %v2317 = vadd.f32 %v2088, %v2316
    %v2318 = vpop.f32.mrb[0].mxu0
    %v2319 = vpop.f32.mrb[0].mxu0
    %v2320 = vpop.f32.mrb[0].mxu0
    %2321 = vdwg.mxu0
    %2322 = vmatprep.subr.bf16.mxu0 0
    %2323 = vmatpush1.bf16.msra.mxu0 %v2234
    %2324 = vmatprep.subr.bf16.mxu0 0
    %2325 = vmatpush1.bf16.msra.mxu0 %v2235
    %2326 = vmatprep.subr.bf16.mxu0 0
    %2327 = vmatpush1.bf16.msra.mxu0 %v2236
    %2328 = vmatprep.subr.bf16.mxu0 0
    %2329 = vmatpush1.bf16.msra.mxu0 %v2237
    %2330 = vmatprep.subr.bf16.mxu0 0
    %2331 = vmatpush1.bf16.msra.mxu0 %v2238
    %2332 = vmatprep.subr.bf16.mxu0 0
    %2333 = vmatpush1.bf16.msra.mxu0 %v2239
    %2334 = vmatprep.subr.bf16.mxu0 0
    %2335 = vmatpush1.bf16.msra.mxu0 %v2240
    %2336 = vmatprep.subr.bf16.mxu0 0
    %2337 = vmatpush1.bf16.msra.mxu0 %v2241
    %2338 = vmatprep.subr.bf16.mxu0 0
    %2339 = vmatpush1.bf16.msra.mxu0 %v2242
    %2340 = vmatprep.subr.bf16.mxu0 0
    %2341 = vmatpush1.bf16.msra.mxu0 %v2243
    %2342 = vmatprep.subr.bf16.mxu0 0
    %2343 = vmatpush1.bf16.msra.mxu0 %v2244
    %2344 = vmatprep.subr.bf16.mxu0 0
    %2345 = vmatpush1.bf16.msra.mxu0 %v2245
    %2346 = vmatprep.subr.bf16.mxu0 0
    %2347 = vmatpush1.bf16.msra.mxu0 %v2246
    %2348 = vmatprep.subr.bf16.mxu0 0
    %2349 = vmatpush1.bf16.msra.mxu0 %v2247
    %2350 = vmatprep.subr.bf16.mxu0 0
    %2351 = vmatpush1.bf16.msra.mxu0 %v2248
    %2352 = vmatprep.subr.bf16.mxu0 0
    %2353 = vmatpush1.bf16.msra.mxu0 %v2249
    %2354 = vmatprep.mubr.bf16.mxu0 %v2018
    %2355 = vmatmul.mubr.bf16.gmra.mrb[0].mxu0 %v2017
    %v2356 = vpop.f32.mrb[0].mxu0
    %v2357 = vadd.f32 %v2317, %v2356
    %v2358 = vpop.f32.mrb[0].mxu0
    %v2359 = vpop.f32.mrb[0].mxu0
    %v2360 = vpop.f32.mrb[0].mxu0
    %2361 = vdwg.mxu0
    %2362 = vmax.xlane.f32.xlu0 %v2357
    %v2363 = vpop.xlane.xlu0 %2362
    %v2364 = vsub.f32 %v2357, %v2363
    %v2365 = vmul.f32 %v2364, 1.442695
    %v2366 = vpow.pop %v2365
    %2367 = vadd.xlane.f32.xlu0 %v2366
    %v2368 = vpop.xlane.xlu0 %2367
    %v2369 = vrcp.pop %v2368
    %v2370 = vmul.f32 %v2366, %v2369
    %2371 = vst [vmem:[#allocation14] sm:$0xff] %v2370
    // Predicated region
    $region58: #{tpu_custom_call.1} parent=1 // pred_check
      _
    $region59: #{tpu_custom_call.1} parent=1 // pred_check_branch
      %2373 = sbr.rel (0) target = $region61
    $region60: #{tpu_custom_call.1} parent=1 // pred_region
      %s2375 = ssub.s32 128, 128
      %2376 = vsyncadd [#allocation4], %s2375
      %s2378 = sshll.u32 [#allocation14], 4
      %s2379 = int_to_ptr.vmem [resolvable:$true] %s2378
      %2381 = dma.vmem_to_hbm [thread:$0]  %s2379, 128, %s7, [#allocation4]
    $region61: #{tpu_custom_call.1} parent=1 // pred_fallthru
      _
    // Predicated region
    $region62: #{tpu_custom_call.1} parent=1 // pred_check
      _
    $region63: #{tpu_custom_call.1} parent=1 // pred_check_branch
      %2383 = sbr.rel (0) target = $region65
    $region64: #{tpu_custom_call.1} parent=1 // pred_region
      %2384 = dma.done [#allocation4], 128
    $region65: #{tpu_custom_call.1} parent=1 // pred_fallthru
      _
    %2385 = vsyncpa [#allocation3], 1
    %2386 = vsyncpa [#allocation6], 1
    %2387 = vsyncpa [#allocation9], 1
    %2388 = vsyncpa [#allocation12], 1
    %2389 = vsyncpa [#allocation4], 1

</llo_original>
